<compile_context>
chip_gen: v6e
topology: v6e:2x2x1
jax: 0.10.0
libtpu: 0.0.40
codegen_flags: <defaults>
</compile_context>

<pallas_src>
import functools

import jax
import jax.numpy as jnp
from jax.experimental import pallas as pl
from jax.experimental.pallas import tpu as pltpu

LANE = 128


def _round_up(v: int, m: int) -> int:
    return (v + m - 1) // m * m


def _erf(x):
    # Abramowitz & Stegun 7.1.26 polynomial, max abs error 1.5e-7 (f32).
    p = 0.3275911
    a1, a2, a3, a4, a5 = (0.254829592, -0.284496736, 1.421413741,
                          -1.453152027, 1.061405429)
    ax = jnp.abs(x)
    t = 1.0 / (1.0 + p * ax)
    poly = ((((a5 * t + a4) * t + a3) * t + a2) * t + a1) * t
    y = 1.0 - poly * jnp.exp(-ax * ax)          # exp -> EUP slot
    return jnp.where(x < 0, -y, y)


def _gelu_exact(x):
    # nn.GELU() default (exact, erf-based) GELU.
    return 0.5 * x * (1.0 + _erf(x * 0.7071067811865475))


def feedback_kernel(x_ref, w1_ref, b1_ref, gamma_ref, beta_ref, w2t_ref, b2_ref,
                    o_ref, sum_ref, sumsq_ref, bias_ref, w2s_ref, *h_cache,
                    m_valid, tm, eps, use_h_cache, needs_mask):
    # grid = (phase, row_tile); phase 0 = BN statistics, phase 1 = apply.
    # NOTE: the output index_map (i * phase, 0) relies on exactly this grid
    # (2 phases, phase outermost): the output block index is pinned to 0 for
    # all of phase 0, so no uninitialized tile is ever flushed to HBM, and
    # every tile is written back exactly once with phase-1 data.
    phase = pl.program_id(0)
    i = pl.program_id(1)
    hc_ref = h_cache[0] if use_h_cache else None

    def compute_h():
        h = jnp.dot(x_ref[...], w1_ref[...],
                    preferred_element_type=jnp.float32) + b1_ref[...]
        return _gelu_exact(h)

    # -------- phase 0: per-channel sum / sum-of-squares (+ cache h) --------
    @pl.when(phase == 0)
    def _stats():
        @pl.when(i == 0)
        def _init():
            sum_ref[...] = jnp.zeros_like(sum_ref)
            sumsq_ref[...] = jnp.zeros_like(sumsq_ref)

        h = compute_h()
        if use_h_cache:
            hc_ref[i] = h.astype(hc_ref.dtype)       # reused in phase 1

        def _accum(hv):
            sum_ref[...] += jnp.sum(hv, axis=0, keepdims=True)
            sumsq_ref[...] += jnp.sum(hv * hv, axis=0, keepdims=True)

        if not needs_mask:
            _accum(h)
        else:
            last = pl.num_programs(1) - 1

            @pl.when(i < last)                        # no padded rows here
            def _plain():
                _accum(h)

            @pl.when(i == last)                       # only last tile is padded
            def _masked():
                row = i * tm + jax.lax.broadcasted_iota(jnp.int32, (tm, 1), 0)
                _accum(jnp.where(row < m_valid, h, 0.0))

    # -------- phase 1: fold BN into Linear-2 and write the output ----------
    @pl.when(phase == 1)
    def _apply():
        @pl.when(i == 0)
        def _finalize_stats():
            inv_m = 1.0 / float(m_valid)
            mean = sum_ref[...] * inv_m
            var = jnp.maximum(sumsq_ref[...] * inv_m - mean * mean, 0.0)
            inv_std = jax.lax.rsqrt(var + eps)                  # EUP rsqrt
            scale = gamma_ref[...] * inv_std                    # (1, H_p)
            shift = beta_ref[...] - mean * scale                # (1, H_p)
            # w2 is stored transposed (m_p, H_p) so the per-channel scale
            # broadcasts along the lane axis (no relayout needed).
            w2t_f32 = w2t_ref[...].astype(jnp.float32)
            w2s_ref[...] = (w2t_f32 * scale).astype(w2s_ref.dtype)
            # bias_fused = shift @ w2 + b2 (tiny one-time matmul; broadcast
            # shift to 8 rows so all matmul dims are tile-friendly).
            shift8 = jnp.broadcast_to(shift, (8, shift.shape[1]))
            bias8 = jax.lax.dot_general(shift8, w2t_f32,
                                        (((1,), (1,)), ((), ())),
                                        preferred_element_type=jnp.float32)
            bias_ref[...] = bias8[0:1, :] + b2_ref[...]

        if use_h_cache:
            h = hc_ref[i]                              # cached activation
        else:
            h = compute_h().astype(w2s_ref.dtype)      # recompute fallback
        acc = jax.lax.dot_general(h, w2s_ref[...], (((1,), (1,)), ((), ())),
                                  preferred_element_type=jnp.float32)
        o_ref[...] = (acc + bias_ref[...]).astype(o_ref.dtype)


@functools.partial(jax.jit, static_argnames=("matmul_dtype", "tm_max",
                                              "single_buffer_consts"))
def feedback_forward(x, w1, b1, gamma, beta, w2, b2, *,
                     matmul_dtype=jnp.float32, tm_max=512,
                     single_buffer_consts=True):
    # x: (S, B, n). Linear(n,H) -> GELU -> BatchNorm1d(H) over all S*B rows
    # (training-mode batch statistics) -> Linear(H, n_m).
    S, B, n = x.shape
    H = w1.shape[1]
    n_m = w2.shape[1]
    M = S * B

    n_p = _round_up(n, LANE)
    H_p = _round_up(H, LANE)
    m_p = _round_up(n_m, LANE)
    it = jnp.dtype(matmul_dtype).itemsize

    # Row tile: amortize per-step overhead, keep the double-buffered x/out
    # tiles well inside VMEM on every generation (v7x: 64 MiB/TC). On v6e/v5e
    # tm_max can be raised toward 1024 when the kernel is x-bandwidth-bound.
    tm = max(16, min(tm_max, _round_up(M, 16)))
    while tm > 16 and 2 * tm * (n_p * it + m_p * 4) > (24 << 20):
        tm = max(16, (tm // 2 + 15) // 16 * 16)
    M_p = _round_up(M, tm)
    n_tiles = M_p // tm
    needs_mask = M_p != M

    # VMEM budget: constant inputs single-buffered, x/out tiles double-buffered.
    weights_bytes = (n_p * H_p + m_p * H_p) * it + 4 * (3 * H_p + m_p)
    tiles_bytes = 2 * tm * n_p * it + 2 * tm * m_p * 4
    scratch_bytes = 4 * (2 * H_p + m_p) + m_p * H_p * it
    cache_bytes = n_tiles * tm * H_p * it
    base_bytes = weights_bytes + tiles_bytes + scratch_bytes
    use_h_cache = (base_bytes + cache_bytes) <= (36 << 20)   # v7x-safe budget
    vmem_need = base_bytes + (cache_bytes if use_h_cache else 0)
    vmem_limit = int(min(max(int(vmem_need * 1.3) + (2 << 20), 32 << 20),
                         48 << 20))

    f32 = jnp.float32
    # Zero padding is semantics-preserving: padded hidden channels have
    # gamma = beta = 0 (folded scale/shift are exactly 0) and padded w2
    # rows/cols are 0, so padded output columns are 0 and are sliced off.
    x2 = x.reshape(M, n)
    if (M_p, n_p) != (M, n):
        x2 = jnp.pad(x2, ((0, M_p - M), (0, n_p - n)))
    x2 = x2.astype(matmul_dtype)                     # single pad+cast step
    w1p = jnp.pad(w1.astype(f32), ((0, n_p - n), (0, H_p - H))).astype(matmul_dtype)
    b1p = jnp.pad(b1.reshape(1, H).astype(f32), ((0, 0), (0, H_p - H)))
    gp = jnp.pad(gamma.reshape(1, H).astype(f32), ((0, 0), (0, H_p - H)))
    bp = jnp.pad(beta.reshape(1, H).astype(f32), ((0, 0), (0, H_p - H)))
    # Keep the second Linear's weight transposed -> (m_p, H_p).
    w2tp = jnp.pad(w2.astype(f32).T, ((0, m_p - n_m), (0, H_p - H))).astype(matmul_dtype)
    b2p = jnp.pad(b2.reshape(1, n_m).astype(f32), ((0, 0), (0, m_p - n_m)))

    kernel = functools.partial(feedback_kernel, m_valid=M, tm=tm, eps=1e-5,
                               use_h_cache=use_h_cache, needs_mask=needs_mask)

    mm1 = 2 * M_p * n_p * H_p
    mm2 = 2 * M_p * H_p * m_p
    flops = (mm1 if use_h_cache else 2 * mm1) + mm2
    transcendentals = (1 if use_h_cache else 2) * M_p * H_p
    bytes_accessed = ((1 if use_h_cache else 2) * M_p * n_p * it
                      + (n_p * H_p + m_p * H_p) * it
                      + 4 * (3 * H_p + m_p) + 4 * M_p * m_p)

    if use_h_cache:
        # Phase 1 reads h from the VMEM cache -> pin x to block 0 (no re-DMA).
        x_index_map = lambda p, i: (i * (1 - p), 0)
    else:
        x_index_map = lambda p, i: (i, 0)
    const = lambda p, i: (0, 0)
    resident = pl.Buffered(1) if single_buffer_consts else None

    scratch_shapes = [
        pltpu.VMEM((1, H_p), jnp.float32),        # per-channel sum
        pltpu.VMEM((1, H_p), jnp.float32),        # per-channel sum of squares
        pltpu.VMEM((1, m_p), jnp.float32),        # bias_fused = shift@w2 + b2
        pltpu.VMEM((m_p, H_p), matmul_dtype),     # BN-scaled w2^T
    ]
    if use_h_cache:
        scratch_shapes.append(pltpu.VMEM((n_tiles, tm, H_p), matmul_dtype))

    out = pl.pallas_call(
        kernel,
        out_shape=jax.ShapeDtypeStruct((M_p, m_p), jnp.float32),
        grid_spec=pltpu.PrefetchScalarGridSpec(
            num_scalar_prefetch=0,
            grid=(2, n_tiles),
            in_specs=[
                pl.BlockSpec((tm, n_p), x_index_map),                      # x
                pl.BlockSpec((n_p, H_p), const, pipeline_mode=resident),   # w1
                pl.BlockSpec((1, H_p), const, pipeline_mode=resident),     # b1
                pl.BlockSpec((1, H_p), const, pipeline_mode=resident),     # gamma
                pl.BlockSpec((1, H_p), const, pipeline_mode=resident),     # beta
                pl.BlockSpec((m_p, H_p), const, pipeline_mode=resident),   # w2^T
                pl.BlockSpec((1, m_p), const, pipeline_mode=resident),     # b2
            ],
            # Phase 0 pins output block 0 (never flushed mid-phase); phase 1
            # walks the row tiles, so each tile is written back exactly once.
            out_specs=pl.BlockSpec((tm, m_p), lambda p, i: (i * p, 0)),
            scratch_shapes=scratch_shapes,
        ),
        # Both axes carry scratch state (BN accumulators / h cache) -> keep
        # them sequential.  TODO(synk): v7x dual-TensorCore split (pl.core_map
        # + shared-memory stats reduction) is not implemented here.
        compiler_params=pltpu.CompilerParams(
            dimension_semantics=("arbitrary", "arbitrary"),
            vmem_limit_bytes=vmem_limit),
        cost_estimate=pl.CostEstimate(flops=int(flops),
                                      transcendentals=int(transcendentals),
                                      bytes_accessed=int(bytes_accessed)),
    )(x2, w1p, b1p, gp, bp, w2tp, b2p)

    return out[:M, :n_m].reshape(S, B, n_m)


def reference_forward(x, w1, b1, gamma, beta, w2, b2):
    # Pure-JAX reference mirroring the PyTorch module (training-mode BN).
    hi = jax.lax.Precision.HIGHEST
    h = jax.nn.gelu(jnp.einsum("sbn,nh->sbh", x, w1, precision=hi) + b1[0],
                    approximate=False)
    mean = jnp.mean(h, axis=(0, 1), keepdims=True)
    var = jnp.mean((h - mean) ** 2, axis=(0, 1), keepdims=True)
    hn = (h - mean) * jax.lax.rsqrt(var + 1e-5) * gamma[0] + beta[0]
    return jnp.einsum("sbh,hm->sbm", hn, w2, precision=hi) + b2[0]


if __name__ == "__main__":
    # Shapes implied by the module: x is (seq, batch, n); Linear(n, hidden),
    # BatchNorm1d(hidden), Linear(hidden, n_m).
    S, B, n, H, n_m = 8, 2, 16, 32, 8

    key = jax.random.PRNGKey(0)
    kx, kw1, kb1, kw2, kb2 = jax.random.split(key, 5)

    x = jax.random.normal(kx, (S, B, n), dtype=jnp.float32)
    # Deterministic synthetic parameters (shapes from __init__).
    w1 = jax.random.normal(kw1, (n, H), dtype=jnp.float32) * (1.0 / jnp.sqrt(n))
    b1 = jax.random.normal(kb1, (1, H), dtype=jnp.float32) * 0.1
    gamma = jnp.ones((1, H), dtype=jnp.float32)   # BatchNorm1d default weight
    beta = jnp.zeros((1, H), dtype=jnp.float32)   # BatchNorm1d default bias
    w2 = jax.random.normal(kw2, (H, n_m), dtype=jnp.float32) * (1.0 / jnp.sqrt(H))
    b2 = jax.random.normal(kb2, (1, n_m), dtype=jnp.float32) * 0.1

    # f32 matmuls for validation; pass matmul_dtype=jnp.bfloat16 at production
    # scale on v6e/v7x for ~2x MXU throughput (f32 accumulation retained).
    try:
        out = feedback_forward(x, w1, b1, gamma, beta, w2, b2)
    except Exception:
        # Fallback for jax builds that reject pipeline_mode on pallas_call
        # inputs: retry with default double-buffered constants.
        out = feedback_forward(x, w1, b1, gamma, beta, w2, b2,
                               single_buffer_consts=False)
    out = jax.block_until_ready(out)

    ref = reference_forward(x, w1, b1, gamma, beta, w2, b2)
    assert out.shape == (S, B, n_m)
    assert jnp.allclose(out, ref, rtol=1e-4, atol=1e-4), "mismatch vs reference"

    print("KERNEL_OK")
</pallas_src>

<mosaic_0001>
module attributes {stable_mosaic.version = 11 : i64} {
  func.func @feedback_kernel(%arg0: i32, %arg1: i32, %arg2: memref<16x128xf32, #tpu.memory_space<vmem>>, %arg3: memref<128x128xf32, #tpu.memory_space<vmem>>, %arg4: memref<1x128xf32, #tpu.memory_space<vmem>>, %arg5: memref<1x128xf32, #tpu.memory_space<vmem>>, %arg6: memref<1x128xf32, #tpu.memory_space<vmem>>, %arg7: memref<128x128xf32, #tpu.memory_space<vmem>>, %arg8: memref<1x128xf32, #tpu.memory_space<vmem>>, %arg9: memref<16x128xf32, #tpu.memory_space<vmem>>, %arg10: memref<1x128xf32, #tpu.memory_space<vmem>>, %arg11: memref<1x128xf32, #tpu.memory_space<vmem>>, %arg12: memref<1x128xf32, #tpu.memory_space<vmem>>, %arg13: memref<128x128xf32, #tpu.memory_space<vmem>>, %arg14: memref<1x16x128xf32, #tpu.memory_space<vmem>>) attributes {dimension_semantics = [#tpu.dimension_semantics<arbitrary>, #tpu.dimension_semantics<arbitrary>], iteration_bounds = array<i64: 2, 1>, scalar_prefetch = 0 : i64, scratch_operands = 5 : i64, tpu.core_type = #tpu.core_type<tc>, window_params = [{transform_indices = @transform_0, window_bounds = array<i64: 16, 128>}, {pipeline_mode = #tpu.pipeline_mode<synchronous>, transform_indices = @transform_1, window_bounds = array<i64: 128, 128>}, {pipeline_mode = #tpu.pipeline_mode<synchronous>, transform_indices = @transform_2, window_bounds = array<i64: 1, 128>}, {pipeline_mode = #tpu.pipeline_mode<synchronous>, transform_indices = @transform_3, window_bounds = array<i64: 1, 128>}, {pipeline_mode = #tpu.pipeline_mode<synchronous>, transform_indices = @transform_4, window_bounds = array<i64: 1, 128>}, {pipeline_mode = #tpu.pipeline_mode<synchronous>, transform_indices = @transform_5, window_bounds = array<i64: 128, 128>}, {pipeline_mode = #tpu.pipeline_mode<synchronous>, transform_indices = @transform_6, window_bounds = array<i64: 1, 128>}, {transform_indices = @transform_7, window_bounds = array<i64: 16, 128>}]} {
    %c0_i32 = arith.constant 0 : i32
    %0 = arith.cmpi eq, %arg0, %c0_i32 : i32
    %1 = arith.extui %0 : i1 to i32
    %c0_i32_0 = arith.constant 0 : i32
    %2 = arith.cmpi ne, %1, %c0_i32_0 : i32
    scf.if %2 {
      %c0_i32_2 = arith.constant 0 : i32
      %6 = arith.cmpi eq, %arg1, %c0_i32_2 : i32
      %7 = arith.extui %6 : i1 to i32
      %c0_i32_3 = arith.constant 0 : i32
      %8 = arith.cmpi ne, %7, %c0_i32_3 : i32
      scf.if %8 {
        %cst_36 = arith.constant 0.000000e+00 : f32
        %70 = vector.broadcast %cst_36 : f32 to vector<1x128xf32>
        %c0_37 = arith.constant 0 : index
        %c0_38 = arith.constant 0 : index
        %71 = vector.load %arg10[%c0_37, %c0_38] : memref<1x128xf32, #tpu.memory_space<vmem>>, vector<1x128xf32>
        tpu.vector_store %arg10[%c0_37, %c0_38], %70 {strides = array<i32>} : memref<1x128xf32, #tpu.memory_space<vmem>>, vector<1x128xf32>,
        %cst_39 = arith.constant 0.000000e+00 : f32
        %72 = vector.broadcast %cst_39 : f32 to vector<1x128xf32>
        %c0_40 = arith.constant 0 : index
        %c0_41 = arith.constant 0 : index
        %73 = vector.load %arg11[%c0_40, %c0_41] : memref<1x128xf32, #tpu.memory_space<vmem>>, vector<1x128xf32>
        tpu.vector_store %arg11[%c0_40, %c0_41], %72 {strides = array<i32>} : memref<1x128xf32, #tpu.memory_space<vmem>>, vector<1x128xf32>,
      } else {
      }
      %c0 = arith.constant 0 : index
      %c0_4 = arith.constant 0 : index
      %9 = vector.load %arg2[%c0, %c0_4] : memref<16x128xf32, #tpu.memory_space<vmem>>, vector<16x128xf32>
      %c0_5 = arith.constant 0 : index
      %c0_6 = arith.constant 0 : index
      %10 = vector.load %arg3[%c0_5, %c0_6] : memref<128x128xf32, #tpu.memory_space<vmem>>, vector<128x128xf32>
      %cst = arith.constant dense<0.000000e+00> : vector<16x128xf32>
      %11 = tpu.matmul %9, %10, %cst {dimension_numbers = #tpu.dot_dimension_numbers<[1], [0], [0], [1], [0, 0, 1, 1], [], []>} : vector<16x128xf32>, vector<128x128xf32>, vector<16x128xf32> -> vector<16x128xf32>
      %c0_7 = arith.constant 0 : index
      %c0_8 = arith.constant 0 : index
      %12 = vector.load %arg4[%c0_7, %c0_8] : memref<1x128xf32, #tpu.memory_space<vmem>>, vector<1x128xf32>
      %13 = vector.broadcast %12 : vector<1x128xf32> to vector<16x128xf32>
      %14 = arith.addf %11, %13 : vector<16x128xf32>
      %cst_9 = arith.constant 5.000000e-01 : f32
      %15 = vector.broadcast %cst_9 : f32 to vector<16x128xf32>
      %16 = arith.mulf %15, %14 : vector<16x128xf32>
      %cst_10 = arith.constant 0.707106769 : f32
      %17 = vector.broadcast %cst_10 : f32 to vector<16x128xf32>
      %18 = arith.mulf %14, %17 : vector<16x128xf32>
      %19 = math.absf %18 : vector<16x128xf32>
      %cst_11 = arith.constant 0.327591091 : f32
      %20 = vector.broadcast %cst_11 : f32 to vector<16x128xf32>
      %21 = arith.mulf %20, %19 : vector<16x128xf32>
      %cst_12 = arith.constant 1.000000e+00 : f32
      %22 = vector.broadcast %cst_12 : f32 to vector<16x128xf32>
      %23 = arith.addf %22, %21 : vector<16x128xf32>
      %cst_13 = arith.constant 1.000000e+00 : f32
      %24 = vector.broadcast %cst_13 : f32 to vector<16x128xf32>
      %25 = arith.divf %24, %23 : vector<16x128xf32>
      %cst_14 = arith.constant 1.06140542 : f32
      %26 = vector.broadcast %cst_14 : f32 to vector<16x128xf32>
      %27 = arith.mulf %26, %25 : vector<16x128xf32>
      %cst_15 = arith.constant -1.45315206 : f32
      %28 = vector.broadcast %cst_15 : f32 to vector<16x128xf32>
      %29 = arith.addf %27, %28 : vector<16x128xf32>
      %30 = arith.mulf %29, %25 : vector<16x128xf32>
      %cst_16 = arith.constant 1.42141378 : f32
      %31 = vector.broadcast %cst_16 : f32 to vector<16x128xf32>
      %32 = arith.addf %30, %31 : vector<16x128xf32>
      %33 = arith.mulf %32, %25 : vector<16x128xf32>
      %cst_17 = arith.constant -0.284496725 : f32
      %34 = vector.broadcast %cst_17 : f32 to vector<16x128xf32>
      %35 = arith.addf %33, %34 : vector<16x128xf32>
      %36 = arith.mulf %35, %25 : vector<16x128xf32>
      %cst_18 = arith.constant 0.254829586 : f32
      %37 = vector.broadcast %cst_18 : f32 to vector<16x128xf32>
      %38 = arith.addf %36, %37 : vector<16x128xf32>
      %39 = arith.mulf %38, %25 : vector<16x128xf32>
      %cst_19 = arith.constant 0.000000e+00 : f32
      %40 = vector.broadcast %cst_19 : f32 to vector<16x128xf32>
      %41 = arith.subf %40, %19 : vector<16x128xf32>
      %42 = arith.mulf %41, %19 : vector<16x128xf32>
      %43 = math.exp %42 : vector<16x128xf32>
      %44 = arith.mulf %39, %43 : vector<16x128xf32>
      %cst_20 = arith.constant 1.000000e+00 : f32
      %45 = vector.broadcast %cst_20 : f32 to vector<16x128xf32>
      %46 = arith.subf %45, %44 : vector<16x128xf32>
      %cst_21 = arith.constant 0.000000e+00 : f32
      %47 = vector.broadcast %cst_21 : f32 to vector<16x128xf32>
      %48 = arith.cmpf olt, %18, %47 : vector<16x128xf32>
      %cst_22 = arith.constant 0.000000e+00 : f32
      %49 = vector.broadcast %cst_22 : f32 to vector<16x128xf32>
      %50 = arith.subf %49, %46 : vector<16x128xf32>
      %51 = arith.select %48, %50, %46 : vector<16x128xi1>, vector<16x128xf32>
      %cst_23 = arith.constant 1.000000e+00 : f32
      %52 = vector.broadcast %cst_23 : f32 to vector<16x128xf32>
      %53 = arith.addf %52, %51 : vector<16x128xf32>
      %54 = arith.mulf %16, %53 : vector<16x128xf32>
      %55 = arith.index_cast %arg1 : i32 to index
      %c0_24 = arith.constant 0 : index
      %c0_25 = arith.constant 0 : index
      %56 = vector.load %arg14[%55, %c0_24, %c0_25] : memref<1x16x128xf32, #tpu.memory_space<vmem>>, vector<1x16x128xf32>
      %57 = vector.shape_cast %56 : vector<1x16x128xf32> to vector<16x128xf32>
      %58 = vector.shape_cast %54 : vector<16x128xf32> to vector<1x16x128xf32>
      tpu.vector_store %arg14[%55, %c0_24, %c0_25], %58 {strides = array<i32>} : memref<1x16x128xf32, #tpu.memory_space<vmem>>, vector<1x16x128xf32>,
      %c0_26 = arith.constant 0 : index
      %c0_27 = arith.constant 0 : index
      %59 = vector.load %arg10[%c0_26, %c0_27] : memref<1x128xf32, #tpu.memory_space<vmem>>, vector<1x128xf32>
      %cst_28 = arith.constant dense<0.000000e+00> : vector<128xf32>
      %60 = vector.multi_reduction <add>, %54, %cst_28 [0] : vector<16x128xf32> to vector<128xf32>
      %61 = vector.shape_cast %60 : vector<128xf32> to vector<1x128xf32>
      %62 = arith.addf %59, %61 : vector<1x128xf32>
      %c0_29 = arith.constant 0 : index
      %c0_30 = arith.constant 0 : index
      %63 = vector.load %arg10[%c0_29, %c0_30] : memref<1x128xf32, #tpu.memory_space<vmem>>, vector<1x128xf32>
      tpu.vector_store %arg10[%c0_29, %c0_30], %62 {strides = array<i32>} : memref<1x128xf32, #tpu.memory_space<vmem>>, vector<1x128xf32>,
      %c0_31 = arith.constant 0 : index
      %c0_32 = arith.constant 0 : index
      %64 = vector.load %arg11[%c0_31, %c0_32] : memref<1x128xf32, #tpu.memory_space<vmem>>, vector<1x128xf32>
      %65 = arith.mulf %54, %54 : vector<16x128xf32>
      %cst_33 = arith.constant dense<0.000000e+00> : vector<128xf32>
      %66 = vector.multi_reduction <add>, %65, %cst_33 [0] : vector<16x128xf32> to vector<128xf32>
      %67 = vector.shape_cast %66 : vector<128xf32> to vector<1x128xf32>
      %68 = arith.addf %64, %67 : vector<1x128xf32>
      %c0_34 = arith.constant 0 : index
      %c0_35 = arith.constant 0 : index
      %69 = vector.load %arg11[%c0_34, %c0_35] : memref<1x128xf32, #tpu.memory_space<vmem>>, vector<1x128xf32>
      tpu.vector_store %arg11[%c0_34, %c0_35], %68 {strides = array<i32>} : memref<1x128xf32, #tpu.memory_space<vmem>>, vector<1x128xf32>,
    } else {
    }
    %c1_i32 = arith.constant 1 : i32
    %3 = arith.cmpi eq, %arg0, %c1_i32 : i32
    %4 = arith.extui %3 : i1 to i32
    %c0_i32_1 = arith.constant 0 : i32
    %5 = arith.cmpi ne, %4, %c0_i32_1 : i32
    scf.if %5 {
      %c0_i32_2 = arith.constant 0 : i32
      %6 = arith.cmpi eq, %arg1, %c0_i32_2 : i32
      %7 = arith.extui %6 : i1 to i32
      %c0_i32_3 = arith.constant 0 : i32
      %8 = arith.cmpi ne, %7, %c0_i32_3 : i32
      scf.if %8 {
        %c0_11 = arith.constant 0 : index
        %c0_12 = arith.constant 0 : index
        %18 = vector.load %arg10[%c0_11, %c0_12] : memref<1x128xf32, #tpu.memory_space<vmem>>, vector<1x128xf32>
        %cst_13 = arith.constant 6.250000e-02 : f32
        %19 = vector.broadcast %cst_13 : f32 to vector<1x128xf32>
        %20 = arith.mulf %18, %19 : vector<1x128xf32>
        %c0_14 = arith.constant 0 : index
        %c0_15 = arith.constant 0 : index
        %21 = vector.load %arg11[%c0_14, %c0_15] : memref<1x128xf32, #tpu.memory_space<vmem>>, vector<1x128xf32>
        %cst_16 = arith.constant 6.250000e-02 : f32
        %22 = vector.broadcast %cst_16 : f32 to vector<1x128xf32>
        %23 = arith.mulf %21, %22 : vector<1x128xf32>
        %24 = arith.mulf %20, %20 : vector<1x128xf32>
        %25 = arith.subf %23, %24 : vector<1x128xf32>
        %cst_17 = arith.constant 0.000000e+00 : f32
        %26 = vector.broadcast %cst_17 : f32 to vector<1x128xf32>
        %27 = arith.maximumf %25, %26 : vector<1x128xf32>
        %cst_18 = arith.constant 9.99999974E-6 : f32
        %28 = vector.broadcast %cst_18 : f32 to vector<1x128xf32>
        %29 = arith.addf %27, %28 : vector<1x128xf32>
        %30 = math.rsqrt %29 : vector<1x128xf32>
        %c0_19 = arith.constant 0 : index
        %c0_20 = arith.constant 0 : index
        %31 = vector.load %arg5[%c0_19, %c0_20] : memref<1x128xf32, #tpu.memory_space<vmem>>, vector<1x128xf32>
        %32 = arith.mulf %31, %30 : vector<1x128xf32>
        %c0_21 = arith.constant 0 : index
        %c0_22 = arith.constant 0 : index
        %33 = vector.load %arg6[%c0_21, %c0_22] : memref<1x128xf32, #tpu.memory_space<vmem>>, vector<1x128xf32>
        %34 = arith.mulf %20, %32 : vector<1x128xf32>
        %35 = arith.subf %33, %34 : vector<1x128xf32>
        %c0_23 = arith.constant 0 : index
        %c0_24 = arith.constant 0 : index
        %36 = vector.load %arg7[%c0_23, %c0_24] : memref<128x128xf32, #tpu.memory_space<vmem>>, vector<128x128xf32>
        %37 = vector.broadcast %32 : vector<1x128xf32> to vector<128x128xf32>
        %38 = arith.mulf %36, %37 : vector<128x128xf32>
        %c0_25 = arith.constant 0 : index
        %c0_26 = arith.constant 0 : index
        %39 = vector.load %arg13[%c0_25, %c0_26] : memref<128x128xf32, #tpu.memory_space<vmem>>, vector<128x128xf32>
        tpu.vector_store %arg13[%c0_25, %c0_26], %38 {strides = array<i32>} : memref<128x128xf32, #tpu.memory_space<vmem>>, vector<128x128xf32>,
        %40 = vector.shape_cast %35 : vector<1x128xf32> to vector<1x128xf32>
        %41 = vector.broadcast %40 : vector<1x128xf32> to vector<8x128xf32>
        %cst_27 = arith.constant dense<0.000000e+00> : vector<8x128xf32>
        %42 = tpu.matmul %41, %36, %cst_27 {dimension_numbers = #tpu.dot_dimension_numbers<[1], [1], [0], [0], [0, 0, 1, 0], [], []>} : vector<8x128xf32>, vector<128x128xf32>, vector<8x128xf32> -> vector<8x128xf32>
        %43 = vector.extract_strided_slice %42 {offsets = [0, 0], sizes = [1, 128], strides = [1, 1]} : vector<8x128xf32> to vector<1x128xf32>
        %c0_28 = arith.constant 0 : index
        %c0_29 = arith.constant 0 : index
        %44 = vector.load %arg8[%c0_28, %c0_29] : memref<1x128xf32, #tpu.memory_space<vmem>>, vector<1x128xf32>
        %45 = arith.addf %43, %44 : vector<1x128xf32>
        %c0_30 = arith.constant 0 : index
        %c0_31 = arith.constant 0 : index
        %46 = vector.load %arg12[%c0_30, %c0_31] : memref<1x128xf32, #tpu.memory_space<vmem>>, vector<1x128xf32>
        tpu.vector_store %arg12[%c0_30, %c0_31], %45 {strides = array<i32>} : memref<1x128xf32, #tpu.memory_space<vmem>>, vector<1x128xf32>,
      } else {
      }
      %9 = arith.index_cast %arg1 : i32 to index
      %c0 = arith.constant 0 : index
      %c0_4 = arith.constant 0 : index
      %10 = vector.load %arg14[%9, %c0, %c0_4] : memref<1x16x128xf32, #tpu.memory_space<vmem>>, vector<1x16x128xf32>
      %11 = vector.shape_cast %10 : vector<1x16x128xf32> to vector<16x128xf32>
      %c0_5 = arith.constant 0 : index
      %c0_6 = arith.constant 0 : index
      %12 = vector.load %arg13[%c0_5, %c0_6] : memref<128x128xf32, #tpu.memory_space<vmem>>, vector<128x128xf32>
      %cst = arith.constant dense<0.000000e+00> : vector<16x128xf32>
      %13 = tpu.matmul %11, %12, %cst {dimension_numbers = #tpu.dot_dimension_numbers<[1], [1], [0], [0], [0, 0, 1, 0], [], []>} : vector<16x128xf32>, vector<128x128xf32>, vector<16x128xf32> -> vector<16x128xf32>
      %c0_7 = arith.constant 0 : index
      %c0_8 = arith.constant 0 : index
      %14 = vector.load %arg12[%c0_7, %c0_8] : memref<1x128xf32, #tpu.memory_space<vmem>>, vector<1x128xf32>
      %15 = vector.broadcast %14 : vector<1x128xf32> to vector<16x128xf32>
      %16 = arith.addf %13, %15 : vector<16x128xf32>
      %c0_9 = arith.constant 0 : index
      %c0_10 = arith.constant 0 : index
      %17 = vector.load %arg9[%c0_9, %c0_10] : memref<16x128xf32, #tpu.memory_space<vmem>>, vector<16x128xf32>
      tpu.vector_store %arg9[%c0_9, %c0_10], %16 {strides = array<i32>} : memref<16x128xf32, #tpu.memory_space<vmem>>, vector<16x128xf32>,
    } else {
    }
    return
  }
  func.func @transform_0(%arg0: i32, %arg1: i32) -> (i32, i32) {
    %c1_i32 = arith.constant 1 : i32
    %0 = arith.subi %c1_i32, %arg0 : i32
    %1 = arith.muli %arg1, %0 : i32
    %c0_i32 = arith.constant 0 : i32
    %c0_i32_0 = arith.constant 0 : i32
    return %1, %c0_i32 : i32, i32
  }
  func.func @transform_1(%arg0: i32, %arg1: i32) -> (i32, i32) {
    %c0_i32 = arith.constant 0 : i32
    %c0_i32_0 = arith.constant 0 : i32
    %c0_i32_1 = arith.constant 0 : i32
    return %c0_i32, %c0_i32_0 : i32, i32
  }
  func.func @transform_2(%arg0: i32, %arg1: i32) -> (i32, i32) {
    %c0_i32 = arith.constant 0 : i32
    %c0_i32_0 = arith.constant 0 : i32
    %c0_i32_1 = arith.constant 0 : i32
    return %c0_i32, %c0_i32_0 : i32, i32
  }
  func.func @transform_3(%arg0: i32, %arg1: i32) -> (i32, i32) {
    %c0_i32 = arith.constant 0 : i32
    %c0_i32_0 = arith.constant 0 : i32
    %c0_i32_1 = arith.constant 0 : i32
    return %c0_i32, %c0_i32_0 : i32, i32
  }
  func.func @transform_4(%arg0: i32, %arg1: i32) -> (i32, i32) {
    %c0_i32 = arith.constant 0 : i32
    %c0_i32_0 = arith.constant 0 : i32
    %c0_i32_1 = arith.constant 0 : i32
    return %c0_i32, %c0_i32_0 : i32, i32
  }
  func.func @transform_5(%arg0: i32, %arg1: i32) -> (i32, i32) {
    %c0_i32 = arith.constant 0 : i32
    %c0_i32_0 = arith.constant 0 : i32
    %c0_i32_1 = arith.constant 0 : i32
    return %c0_i32, %c0_i32_0 : i32, i32
  }
  func.func @transform_6(%arg0: i32, %arg1: i32) -> (i32, i32) {
    %c0_i32 = arith.constant 0 : i32
    %c0_i32_0 = arith.constant 0 : i32
    %c0_i32_1 = arith.constant 0 : i32
    return %c0_i32, %c0_i32_0 : i32, i32
  }
  func.func @transform_7(%arg0: i32, %arg1: i32) -> (i32, i32) {
    %0 = arith.muli %arg1, %arg0 : i32
    %c0_i32 = arith.constant 0 : i32
    %c0_i32_0 = arith.constant 0 : i32
    return %0, %c0_i32 : i32, i32
  }
}

module attributes {stable_mosaic.version = 11 : i64} {
  func.func @feedback_kernel(%arg0: i32, %arg1: i32, %arg2: memref<16x128xf32, #tpu.memory_space<vmem>>, %arg3: memref<128x128xf32, #tpu.memory_space<vmem>>, %arg4: memref<1x128xf32, #tpu.memory_space<vmem>>, %arg5: memref<1x128xf32, #tpu.memory_space<vmem>>, %arg6: memref<1x128xf32, #tpu.memory_space<vmem>>, %arg7: memref<128x128xf32, #tpu.memory_space<vmem>>, %arg8: memref<1x128xf32, #tpu.memory_space<vmem>>, %arg9: memref<16x128xf32, #tpu.memory_space<vmem>>, %arg10: memref<1x128xf32, #tpu.memory_space<vmem>>, %arg11: memref<1x128xf32, #tpu.memory_space<vmem>>, %arg12: memref<1x128xf32, #tpu.memory_space<vmem>>, %arg13: memref<128x128xf32, #tpu.memory_space<vmem>>, %arg14: memref<1x16x128xf32, #tpu.memory_space<vmem>>) attributes {dimension_semantics = [#tpu.dimension_semantics<arbitrary>, #tpu.dimension_semantics<arbitrary>], iteration_bounds = array<i64: 2, 1>, scalar_prefetch = 0 : i64, scratch_operands = 5 : i64, tpu.core_type = #tpu.core_type<tc>, window_params = [{transform_indices = @transform_0, window_bounds = array<i64: 16, 128>}, {pipeline_mode = #tpu.pipeline_mode<synchronous>, transform_indices = @transform_1, window_bounds = array<i64: 128, 128>}, {pipeline_mode = #tpu.pipeline_mode<synchronous>, transform_indices = @transform_2, window_bounds = array<i64: 1, 128>}, {pipeline_mode = #tpu.pipeline_mode<synchronous>, transform_indices = @transform_3, window_bounds = array<i64: 1, 128>}, {pipeline_mode = #tpu.pipeline_mode<synchronous>, transform_indices = @transform_4, window_bounds = array<i64: 1, 128>}, {pipeline_mode = #tpu.pipeline_mode<synchronous>, transform_indices = @transform_5, window_bounds = array<i64: 128, 128>}, {pipeline_mode = #tpu.pipeline_mode<synchronous>, transform_indices = @transform_6, window_bounds = array<i64: 1, 128>}, {transform_indices = @transform_7, window_bounds = array<i64: 16, 128>}]} {
    %c0_i32 = arith.constant 0 : i32
    %0 = arith.cmpi eq, %arg0, %c0_i32 : i32
    %1 = arith.extui %0 : i1 to i32
    %c0_i32_0 = arith.constant 0 : i32
    %2 = arith.cmpi ne, %1, %c0_i32_0 : i32
    scf.if %2 {
      %c0_i32_2 = arith.constant 0 : i32
      %6 = arith.cmpi eq, %arg1, %c0_i32_2 : i32
      %7 = arith.extui %6 : i1 to i32
      %c0_i32_3 = arith.constant 0 : i32
      %8 = arith.cmpi ne, %7, %c0_i32_3 : i32
      scf.if %8 {
        %cst_36 = arith.constant 0.000000e+00 : f32
        %70 = vector.broadcast %cst_36 : f32 to vector<1x128xf32>
        %c0_37 = arith.constant 0 : index
        %c0_38 = arith.constant 0 : index
        %71 = vector.load %arg10[%c0_37, %c0_38] : memref<1x128xf32, #tpu.memory_space<vmem>>, vector<1x128xf32>
        tpu.vector_store %arg10[%c0_37, %c0_38], %70 {strides = array<i32>} : memref<1x128xf32, #tpu.memory_space<vmem>>, vector<1x128xf32>,
        %cst_39 = arith.constant 0.000000e+00 : f32
        %72 = vector.broadcast %cst_39 : f32 to vector<1x128xf32>
        %c0_40 = arith.constant 0 : index
        %c0_41 = arith.constant 0 : index
        %73 = vector.load %arg11[%c0_40, %c0_41] : memref<1x128xf32, #tpu.memory_space<vmem>>, vector<1x128xf32>
        tpu.vector_store %arg11[%c0_40, %c0_41], %72 {strides = array<i32>} : memref<1x128xf32, #tpu.memory_space<vmem>>, vector<1x128xf32>,
      } else {
      }
      %c0 = arith.constant 0 : index
      %c0_4 = arith.constant 0 : index
      %9 = vector.load %arg2[%c0, %c0_4] : memref<16x128xf32, #tpu.memory_space<vmem>>, vector<16x128xf32>
      %c0_5 = arith.constant 0 : index
      %c0_6 = arith.constant 0 : index
      %10 = vector.load %arg3[%c0_5, %c0_6] : memref<128x128xf32, #tpu.memory_space<vmem>>, vector<128x128xf32>
      %cst = arith.constant dense<0.000000e+00> : vector<16x128xf32>
      %11 = tpu.matmul %9, %10, %cst {dimension_numbers = #tpu.dot_dimension_numbers<[1], [0], [0], [1], [0, 0, 1, 1], [], []>} : vector<16x128xf32>, vector<128x128xf32>, vector<16x128xf32> -> vector<16x128xf32>
      %c0_7 = arith.constant 0 : index
      %c0_8 = arith.constant 0 : index
      %12 = vector.load %arg4[%c0_7, %c0_8] : memref<1x128xf32, #tpu.memory_space<vmem>>, vector<1x128xf32>
      %13 = vector.broadcast %12 : vector<1x128xf32> to vector<16x128xf32>
      %14 = arith.addf %11, %13 : vector<16x128xf32>
      %cst_9 = arith.constant 5.000000e-01 : f32
      %15 = vector.broadcast %cst_9 : f32 to vector<16x128xf32>
      %16 = arith.mulf %15, %14 : vector<16x128xf32>
      %cst_10 = arith.constant 0.707106769 : f32
      %17 = vector.broadcast %cst_10 : f32 to vector<16x128xf32>
      %18 = arith.mulf %14, %17 : vector<16x128xf32>
      %19 = math.absf %18 : vector<16x128xf32>
      %cst_11 = arith.constant 0.327591091 : f32
      %20 = vector.broadcast %cst_11 : f32 to vector<16x128xf32>
      %21 = arith.mulf %20, %19 : vector<16x128xf32>
      %cst_12 = arith.constant 1.000000e+00 : f32
      %22 = vector.broadcast %cst_12 : f32 to vector<16x128xf32>
      %23 = arith.addf %22, %21 : vector<16x128xf32>
      %cst_13 = arith.constant 1.000000e+00 : f32
      %24 = vector.broadcast %cst_13 : f32 to vector<16x128xf32>
      %25 = arith.divf %24, %23 : vector<16x128xf32>
      %cst_14 = arith.constant 1.06140542 : f32
      %26 = vector.broadcast %cst_14 : f32 to vector<16x128xf32>
      %27 = arith.mulf %26, %25 : vector<16x128xf32>
      %cst_15 = arith.constant -1.45315206 : f32
      %28 = vector.broadcast %cst_15 : f32 to vector<16x128xf32>
      %29 = arith.addf %27, %28 : vector<16x128xf32>
      %30 = arith.mulf %29, %25 : vector<16x128xf32>
      %cst_16 = arith.constant 1.42141378 : f32
      %31 = vector.broadcast %cst_16 : f32 to vector<16x128xf32>
      %32 = arith.addf %30, %31 : vector<16x128xf32>
      %33 = arith.mulf %32, %25 : vector<16x128xf32>
      %cst_17 = arith.constant -0.284496725 : f32
      %34 = vector.broadcast %cst_17 : f32 to vector<16x128xf32>
      %35 = arith.addf %33, %34 : vector<16x128xf32>
      %36 = arith.mulf %35, %25 : vector<16x128xf32>
      %cst_18 = arith.constant 0.254829586 : f32
      %37 = vector.broadcast %cst_18 : f32 to vector<16x128xf32>
      %38 = arith.addf %36, %37 : vector<16x128xf32>
      %39 = arith.mulf %38, %25 : vector<16x128xf32>
      %cst_19 = arith.constant 0.000000e+00 : f32
      %40 = vector.broadcast %cst_19 : f32 to vector<16x128xf32>
      %41 = arith.subf %40, %19 : vector<16x128xf32>
      %42 = arith.mulf %41, %19 : vector<16x128xf32>
      %43 = math.exp %42 : vector<16x128xf32>
      %44 = arith.mulf %39, %43 : vector<16x128xf32>
      %cst_20 = arith.constant 1.000000e+00 : f32
      %45 = vector.broadcast %cst_20 : f32 to vector<16x128xf32>
      %46 = arith.subf %45, %44 : vector<16x128xf32>
      %cst_21 = arith.constant 0.000000e+00 : f32
      %47 = vector.broadcast %cst_21 : f32 to vector<16x128xf32>
      %48 = arith.cmpf olt, %18, %47 : vector<16x128xf32>
      %cst_22 = arith.constant 0.000000e+00 : f32
      %49 = vector.broadcast %cst_22 : f32 to vector<16x128xf32>
      %50 = arith.subf %49, %46 : vector<16x128xf32>
      %51 = arith.select %48, %50, %46 : vector<16x128xi1>, vector<16x128xf32>
      %cst_23 = arith.constant 1.000000e+00 : f32
      %52 = vector.broadcast %cst_23 : f32 to vector<16x128xf32>
      %53 = arith.addf %52, %51 : vector<16x128xf32>
      %54 = arith.mulf %16, %53 : vector<16x128xf32>
      %55 = arith.index_cast %arg1 : i32 to index
      %c0_24 = arith.constant 0 : index
      %c0_25 = arith.constant 0 : index
      %56 = vector.load %arg14[%55, %c0_24, %c0_25] : memref<1x16x128xf32, #tpu.memory_space<vmem>>, vector<1x16x128xf32>
      %57 = vector.shape_cast %56 : vector<1x16x128xf32> to vector<16x128xf32>
      %58 = vector.shape_cast %54 : vector<16x128xf32> to vector<1x16x128xf32>
      tpu.vector_store %arg14[%55, %c0_24, %c0_25], %58 {strides = array<i32>} : memref<1x16x128xf32, #tpu.memory_space<vmem>>, vector<1x16x128xf32>,
      %c0_26 = arith.constant 0 : index
      %c0_27 = arith.constant 0 : index
      %59 = vector.load %arg10[%c0_26, %c0_27] : memref<1x128xf32, #tpu.memory_space<vmem>>, vector<1x128xf32>
      %cst_28 = arith.constant dense<0.000000e+00> : vector<128xf32>
      %60 = vector.multi_reduction <add>, %54, %cst_28 [0] : vector<16x128xf32> to vector<128xf32>
      %61 = vector.shape_cast %60 : vector<128xf32> to vector<1x128xf32>
      %62 = arith.addf %59, %61 : vector<1x128xf32>
      %c0_29 = arith.constant 0 : index
      %c0_30 = arith.constant 0 : index
      %63 = vector.load %arg10[%c0_29, %c0_30] : memref<1x128xf32, #tpu.memory_space<vmem>>, vector<1x128xf32>
      tpu.vector_store %arg10[%c0_29, %c0_30], %62 {strides = array<i32>} : memref<1x128xf32, #tpu.memory_space<vmem>>, vector<1x128xf32>,
      %c0_31 = arith.constant 0 : index
      %c0_32 = arith.constant 0 : index
      %64 = vector.load %arg11[%c0_31, %c0_32] : memref<1x128xf32, #tpu.memory_space<vmem>>, vector<1x128xf32>
      %65 = arith.mulf %54, %54 : vector<16x128xf32>
      %cst_33 = arith.constant dense<0.000000e+00> : vector<128xf32>
      %66 = vector.multi_reduction <add>, %65, %cst_33 [0] : vector<16x128xf32> to vector<128xf32>
      %67 = vector.shape_cast %66 : vector<128xf32> to vector<1x128xf32>
      %68 = arith.addf %64, %67 : vector<1x128xf32>
      %c0_34 = arith.constant 0 : index
      %c0_35 = arith.constant 0 : index
      %69 = vector.load %arg11[%c0_34, %c0_35] : memref<1x128xf32, #tpu.memory_space<vmem>>, vector<1x128xf32>
      tpu.vector_store %arg11[%c0_34, %c0_35], %68 {strides = array<i32>} : memref<1x128xf32, #tpu.memory_space<vmem>>, vector<1x128xf32>,
    } else {
    }
    %c1_i32 = arith.constant 1 : i32
    %3 = arith.cmpi eq, %arg0, %c1_i32 : i32
    %4 = arith.extui %3 : i1 to i32
    %c0_i32_1 = arith.constant 0 : i32
    %5 = arith.cmpi ne, %4, %c0_i32_1 : i32
    scf.if %5 {
      %c0_i32_2 = arith.constant 0 : i32
      %6 = arith.cmpi eq, %arg1, %c0_i32_2 : i32
      %7 = arith.extui %6 : i1 to i32
      %c0_i32_3 = arith.constant 0 : i32
      %8 = arith.cmpi ne, %7, %c0_i32_3 : i32
      scf.if %8 {
        %c0_11 = arith.constant 0 : index
        %c0_12 = arith.constant 0 : index
        %18 = vector.load %arg10[%c0_11, %c0_12] : memref<1x128xf32, #tpu.memory_space<vmem>>, vector<1x128xf32>
        %cst_13 = arith.constant 6.250000e-02 : f32
        %19 = vector.broadcast %cst_13 : f32 to vector<1x128xf32>
        %20 = arith.mulf %18, %19 : vector<1x128xf32>
        %c0_14 = arith.constant 0 : index
        %c0_15 = arith.constant 0 : index
        %21 = vector.load %arg11[%c0_14, %c0_15] : memref<1x128xf32, #tpu.memory_space<vmem>>, vector<1x128xf32>
        %cst_16 = arith.constant 6.250000e-02 : f32
        %22 = vector.broadcast %cst_16 : f32 to vector<1x128xf32>
        %23 = arith.mulf %21, %22 : vector<1x128xf32>
        %24 = arith.mulf %20, %20 : vector<1x128xf32>
        %25 = arith.subf %23, %24 : vector<1x128xf32>
        %cst_17 = arith.constant 0.000000e+00 : f32
        %26 = vector.broadcast %cst_17 : f32 to vector<1x128xf32>
        %27 = arith.maximumf %25, %26 : vector<1x128xf32>
        %cst_18 = arith.constant 9.99999974E-6 : f32
        %28 = vector.broadcast %cst_18 : f32 to vector<1x128xf32>
        %29 = arith.addf %27, %28 : vector<1x128xf32>
        %30 = math.rsqrt %29 : vector<1x128xf32>
        %c0_19 = arith.constant 0 : index
        %c0_20 = arith.constant 0 : index
        %31 = vector.load %arg5[%c0_19, %c0_20] : memref<1x128xf32, #tpu.memory_space<vmem>>, vector<1x128xf32>
        %32 = arith.mulf %31, %30 : vector<1x128xf32>
        %c0_21 = arith.constant 0 : index
        %c0_22 = arith.constant 0 : index
        %33 = vector.load %arg6[%c0_21, %c0_22] : memref<1x128xf32, #tpu.memory_space<vmem>>, vector<1x128xf32>
        %34 = arith.mulf %20, %32 : vector<1x128xf32>
        %35 = arith.subf %33, %34 : vector<1x128xf32>
        %c0_23 = arith.constant 0 : index
        %c0_24 = arith.constant 0 : index
        %36 = vector.load %arg7[%c0_23, %c0_24] : memref<128x128xf32, #tpu.memory_space<vmem>>, vector<128x128xf32>
        %37 = vector.broadcast %32 : vector<1x128xf32> to vector<128x128xf32>
        %38 = arith.mulf %36, %37 : vector<128x128xf32>
        %c0_25 = arith.constant 0 : index
        %c0_26 = arith.constant 0 : index
        %39 = vector.load %arg13[%c0_25, %c0_26] : memref<128x128xf32, #tpu.memory_space<vmem>>, vector<128x128xf32>
        tpu.vector_store %arg13[%c0_25, %c0_26], %38 {strides = array<i32>} : memref<128x128xf32, #tpu.memory_space<vmem>>, vector<128x128xf32>,
        %40 = vector.shape_cast %35 : vector<1x128xf32> to vector<1x128xf32>
        %41 = vector.broadcast %40 : vector<1x128xf32> to vector<8x128xf32>
        %cst_27 = arith.constant dense<0.000000e+00> : vector<8x128xf32>
        %42 = tpu.matmul %41, %36, %cst_27 {dimension_numbers = #tpu.dot_dimension_numbers<[1], [1], [0], [0], [0, 0, 1, 0], [], []>} : vector<8x128xf32>, vector<128x128xf32>, vector<8x128xf32> -> vector<8x128xf32>
        %43 = vector.extract_strided_slice %42 {offsets = [0, 0], sizes = [1, 128], strides = [1, 1]} : vector<8x128xf32> to vector<1x128xf32>
        %c0_28 = arith.constant 0 : index
        %c0_29 = arith.constant 0 : index
        %44 = vector.load %arg8[%c0_28, %c0_29] : memref<1x128xf32, #tpu.memory_space<vmem>>, vector<1x128xf32>
        %45 = arith.addf %43, %44 : vector<1x128xf32>
        %c0_30 = arith.constant 0 : index
        %c0_31 = arith.constant 0 : index
        %46 = vector.load %arg12[%c0_30, %c0_31] : memref<1x128xf32, #tpu.memory_space<vmem>>, vector<1x128xf32>
        tpu.vector_store %arg12[%c0_30, %c0_31], %45 {strides = array<i32>} : memref<1x128xf32, #tpu.memory_space<vmem>>, vector<1x128xf32>,
      } else {
      }
      %9 = arith.index_cast %arg1 : i32 to index
      %c0 = arith.constant 0 : index
      %c0_4 = arith.constant 0 : index
      %10 = vector.load %arg14[%9, %c0, %c0_4] : memref<1x16x128xf32, #tpu.memory_space<vmem>>, vector<1x16x128xf32>
      %11 = vector.shape_cast %10 : vector<1x16x128xf32> to vector<16x128xf32>
      %c0_5 = arith.constant 0 : index
      %c0_6 = arith.constant 0 : index
      %12 = vector.load %arg13[%c0_5, %c0_6] : memref<128x128xf32, #tpu.memory_space<vmem>>, vector<128x128xf32>
      %cst = arith.constant dense<0.000000e+00> : vector<16x128xf32>
      %13 = tpu.matmul %11, %12, %cst {dimension_numbers = #tpu.dot_dimension_numbers<[1], [1], [0], [0], [0, 0, 1, 0], [], []>} : vector<16x128xf32>, vector<128x128xf32>, vector<16x128xf32> -> vector<16x128xf32>
      %c0_7 = arith.constant 0 : index
      %c0_8 = arith.constant 0 : index
      %14 = vector.load %arg12[%c0_7, %c0_8] : memref<1x128xf32, #tpu.memory_space<vmem>>, vector<1x128xf32>
      %15 = vector.broadcast %14 : vector<1x128xf32> to vector<16x128xf32>
      %16 = arith.addf %13, %15 : vector<16x128xf32>
      %c0_9 = arith.constant 0 : index
      %c0_10 = arith.constant 0 : index
      %17 = vector.load %arg9[%c0_9, %c0_10] : memref<16x128xf32, #tpu.memory_space<vmem>>, vector<16x128xf32>
      tpu.vector_store %arg9[%c0_9, %c0_10], %16 {strides = array<i32>} : memref<16x128xf32, #tpu.memory_space<vmem>>, vector<16x128xf32>,
    } else {
    }
    return
  }
  func.func @transform_0(%arg0: i32, %arg1: i32) -> (i32, i32) {
    %c1_i32 = arith.constant 1 : i32
    %0 = arith.subi %c1_i32, %arg0 : i32
    %1 = arith.muli %arg1, %0 : i32
    %c0_i32 = arith.constant 0 : i32
    %c0_i32_0 = arith.constant 0 : i32
    return %1, %c0_i32 : i32, i32
  }
  func.func @transform_1(%arg0: i32, %arg1: i32) -> (i32, i32) {
    %c0_i32 = arith.constant 0 : i32
    %c0_i32_0 = arith.constant 0 : i32
    %c0_i32_1 = arith.constant 0 : i32
    return %c0_i32, %c0_i32_0 : i32, i32
  }
  func.func @transform_2(%arg0: i32, %arg1: i32) -> (i32, i32) {
    %c0_i32 = arith.constant 0 : i32
    %c0_i32_0 = arith.constant 0 : i32
    %c0_i32_1 = arith.constant 0 : i32
    return %c0_i32, %c0_i32_0 : i32, i32
  }
  func.func @transform_3(%arg0: i32, %arg1: i32) -> (i32, i32) {
    %c0_i32 = arith.constant 0 : i32
    %c0_i32_0 = arith.constant 0 : i32
    %c0_i32_1 = arith.constant 0 : i32
    return %c0_i32, %c0_i32_0 : i32, i32
  }
  func.func @transform_4(%arg0: i32, %arg1: i32) -> (i32, i32) {
    %c0_i32 = arith.constant 0 : i32
    %c0_i32_0 = arith.constant 0 : i32
    %c0_i32_1 = arith.constant 0 : i32
    return %c0_i32, %c0_i32_0 : i32, i32
  }
  func.func @transform_5(%arg0: i32, %arg1: i32) -> (i32, i32) {
    %c0_i32 = arith.constant 0 : i32
    %c0_i32_0 = arith.constant 0 : i32
    %c0_i32_1 = arith.constant 0 : i32
    return %c0_i32, %c0_i32_0 : i32, i32
  }
  func.func @transform_6(%arg0: i32, %arg1: i32) -> (i32, i32) {
    %c0_i32 = arith.constant 0 : i32
    %c0_i32_0 = arith.constant 0 : i32
    %c0_i32_1 = arith.constant 0 : i32
    return %c0_i32, %c0_i32_0 : i32, i32
  }
  func.func @transform_7(%arg0: i32, %arg1: i32) -> (i32, i32) {
    %0 = arith.muli %arg1, %arg0 : i32
    %c0_i32 = arith.constant 0 : i32
    %c0_i32_0 = arith.constant 0 : i32
    return %0, %c0_i32 : i32, i32
  }
}

</mosaic_0001>

<llo_original>
// kernel: feedback_forward.1
$region0: #{feedback_forward.1}
  #allocation0 [shape = 'u32[]', space=smem, size = 0x4, offset = 0x4, fixed_abs, tag = 'smem constant byte address 0x4 - core index']
  #allocation1 [shape = 'u32[144,128]{1,0:T(1,128)}', space=vmem, size = 0x12000, scoped, tag = 'internal scratch']
  #allocation2 [shape = 'f32[1,128]{1,0:T(1,128)}', space=vmem, size = 0x200, scoped, tag = 'scratch operand']
  #allocation3 [shape = 'f32[1,128]{1,0:T(1,128)}', space=vmem, size = 0x200, scoped, tag = 'scratch operand']
  #allocation4 [shape = 'f32[1,128]{1,0:T(1,128)}', space=vmem, size = 0x200, scoped, tag = 'scratch operand']
  #allocation5 [shape = 'f32[128,128]{1,0:T(8,128)}', space=vmem, size = 0x10000, scoped, tag = 'scratch operand']
  #allocation6 [shape = 'f32[1,16,128]{2,1,0:T(8,128)}', space=vmem, size = 0x2000, scoped, tag = 'scratch operand']
  %s0 = inlined_call_operand.vmem [shape: f32[16,128], index: 0, kind: input, shape index: {}]
  %s1 = inlined_call_operand.vmem [shape: f32[128,128], index: 1, kind: input, shape index: {}]
  %s2 = inlined_call_operand.vmem [shape: f32[1,128], index: 2, kind: input, shape index: {}]
  %s3 = inlined_call_operand.vmem [shape: f32[1,128], index: 3, kind: input, shape index: {}]
  %s4 = inlined_call_operand.vmem [shape: f32[1,128], index: 4, kind: input, shape index: {}]
  %s5 = inlined_call_operand.vmem [shape: f32[128,128], index: 5, kind: input, shape index: {}]
  %s6 = inlined_call_operand.vmem [shape: f32[1,128], index: 6, kind: input, shape index: {}]
  %s7 = inlined_call_operand.hbm [shape: f32[16,128], index: 7, kind: output, shape index: {}]
  %s8 = sld [smem:[#allocation0]]
  $region77: #{feedback_forward.1} parent=0
    _
  %s10 = ssub.s32 1, %s8
  %s11 = scalar_select 0, %s10, %s8
  $region1: #{feedback_forward.1} parent=0
    #allocation7 [shape = 'u8[16384]{0}', space=vmem, size = 0x4000, scoped, tag = 'output window, operand 0']
    #allocation8 [shape = 's32[2]{0}', space=sflag, size = 0x8, scoped, tag = 'scoped memory for feedback_forward.1']
    %12 = vsyncpa [#allocation8], 0
    %s13 = scalar_lea.sflag [#allocation8], 1
    %14 = vsyncpa %s13, 0
    loop: start=0, step=1, limit=4
    $region2: #{feedback_forward.1} parent=1 // loop_pre_header
      _
    $region3: #{feedback_forward.1} parent=1 // loop_header
      %s16 = sphi 0, %s20
      %p17 = scmp.ge.s32.totalorder %s16, 4
      %s23 = sphi 0, %s35
      %s24 = sphi 0, %s31
      %s25 = sphi 0, %s23
      %s26 = sphi 0, %s24
      %s27 = sphi 0, %s25
      %s28 = sphi 0, %s26
      %s42 = sphi 0, %s44
      %s45 = sphi 0, %s42
      %s46 = sphi 0, %s45
      %s62 = sphi 0, %s46
      %s66 = sphi 0, %s66
      %s68 = sphi 0, %s66
      %s69 = sphi 0, %s68
      %s83 = sphi 0, %s69
      %s87 = sphi 0, %s87
      %s89 = sphi 0, %s87
      %s90 = sphi 0, %s89
      %s104 = sphi 0, %s90
      %s108 = sphi 0, %s108
      %s110 = sphi 0, %s108
      %s111 = sphi 0, %s110
      %s125 = sphi 0, %s111
      %s129 = sphi 0, %s129
      %s131 = sphi 0, %s129
      %s132 = sphi 0, %s131
      %s146 = sphi 0, %s132
      %s150 = sphi 0, %s150
      %s152 = sphi 0, %s150
      %s153 = sphi 0, %s152
      %s167 = sphi 0, %s153
      %s171 = sphi 0, %s171
      %s173 = sphi 0, %s171
      %s174 = sphi 0, %s173
      %s188 = sphi 0, %s174
      %s196 = sphi 0, %s198
      %s199 = sphi 0, %s196
      %s200 = sphi 0, %s199
      %s216 = sphi 0, %s200
    $region4: #{feedback_forward.1} parent=1 // loop_header_branch
      %19 = sbr.rel (%p17) target = $region8
    $region5: #{feedback_forward.1} parent=1 // loop_body
      %s21 = ssub.s32 %s16, 1
      %s22 = ssub.s32 %s16, 2
      %s29 = sadd.s32 1, %s24
      %p30 = scmp.ge.s32.totalorder %s29, 1
      %s31 = scalar_select %p30, 0, %s29
      %s32 = sadd.s32 1, %s23
      %s33 = scalar_select %p30, %s32, %s23
      %p34 = scmp.ge.s32.totalorder %s33, 2
      %s35 = scalar_select %p34, 0, %s33
      %s36 = ssub.s32 1, %s23
      %s37 = smul.u32 %s24, %s36
      %s38 = ssub.s32 1, %s35
      %s39 = smul.u32 %s31, %s38
      %s40 = ssub.s32 %s37, %s39
      %p41 = scmp.eq.s32.totalorder %s40, 0
      %s43 = sadd.s32 %s42, 1
      %s44 = scalar_select %p41, %s42, %s43
      %p47 = pneg %p41
      %p48 = scmp.eq.s32.totalorder %s16, 1
      %p49 = por %p47, %p48
      %p50 = scmp.ne.s32.totalorder %s42, %s45
      %p51 = scmp.eq.s32.totalorder %s16, 0
      %p52 = por %p50, %p51
      %p53 = scmp.ne.s32.totalorder %s42, %s45
      %p54 = scmp.eq.s32.totalorder %s21, 1
      %p55 = por %p53, %p54
      %p56 = scmp.ne.s32.totalorder %s45, %s46
      %p57 = scmp.eq.s32.totalorder %s21, 0
      %p58 = por %p56, %p57
      %p59 = scmp.ne.s32.totalorder %s45, %s46
      %p60 = scmp.eq.s32.totalorder %s22, 1
      %p61 = por %p59, %p60
      %p63 = scmp.ne.s32.totalorder %s46, %s62
      %p64 = scmp.eq.s32.totalorder %s22, 0
      %p65 = por %p63, %p64
      %s67 = sadd.s32 %s66, 1
      %p70 = scmp.eq.s32.totalorder %s16, 1
      %p71 = scmp.ne.s32.totalorder %s66, %s68
      %p72 = scmp.eq.s32.totalorder %s16, 0
      %p73 = por %p71, %p72
      %p74 = scmp.ne.s32.totalorder %s66, %s68
      %p75 = scmp.eq.s32.totalorder %s21, 1
      %p76 = por %p74, %p75
      %p77 = scmp.ne.s32.totalorder %s68, %s69
      %p78 = scmp.eq.s32.totalorder %s21, 0
      %p79 = por %p77, %p78
      %p80 = scmp.ne.s32.totalorder %s68, %s69
      %p81 = scmp.eq.s32.totalorder %s22, 1
      %p82 = por %p80, %p81
      %p84 = scmp.ne.s32.totalorder %s69, %s83
      %p85 = scmp.eq.s32.totalorder %s22, 0
      %p86 = por %p84, %p85
      %s88 = sadd.s32 %s87, 1
      %p91 = scmp.eq.s32.totalorder %s16, 1
      %p92 = scmp.ne.s32.totalorder %s87, %s89
      %p93 = scmp.eq.s32.totalorder %s16, 0
      %p94 = por %p92, %p93
      %p95 = scmp.ne.s32.totalorder %s87, %s89
      %p96 = scmp.eq.s32.totalorder %s21, 1
      %p97 = por %p95, %p96
      %p98 = scmp.ne.s32.totalorder %s89, %s90
      %p99 = scmp.eq.s32.totalorder %s21, 0
      %p100 = por %p98, %p99
      %p101 = scmp.ne.s32.totalorder %s89, %s90
      %p102 = scmp.eq.s32.totalorder %s22, 1
      %p103 = por %p101, %p102
      %p105 = scmp.ne.s32.totalorder %s90, %s104
      %p106 = scmp.eq.s32.totalorder %s22, 0
      %p107 = por %p105, %p106
      %s109 = sadd.s32 %s108, 1
      %p112 = scmp.eq.s32.totalorder %s16, 1
      %p113 = scmp.ne.s32.totalorder %s108, %s110
      %p114 = scmp.eq.s32.totalorder %s16, 0
      %p115 = por %p113, %p114
      %p116 = scmp.ne.s32.totalorder %s108, %s110
      %p117 = scmp.eq.s32.totalorder %s21, 1
      %p118 = por %p116, %p117
      %p119 = scmp.ne.s32.totalorder %s110, %s111
      %p120 = scmp.eq.s32.totalorder %s21, 0
      %p121 = por %p119, %p120
      %p122 = scmp.ne.s32.totalorder %s110, %s111
      %p123 = scmp.eq.s32.totalorder %s22, 1
      %p124 = por %p122, %p123
      %p126 = scmp.ne.s32.totalorder %s111, %s125
      %p127 = scmp.eq.s32.totalorder %s22, 0
      %p128 = por %p126, %p127
      %s130 = sadd.s32 %s129, 1
      %p133 = scmp.eq.s32.totalorder %s16, 1
      %p134 = scmp.ne.s32.totalorder %s129, %s131
      %p135 = scmp.eq.s32.totalorder %s16, 0
      %p136 = por %p134, %p135
      %p137 = scmp.ne.s32.totalorder %s129, %s131
      %p138 = scmp.eq.s32.totalorder %s21, 1
      %p139 = por %p137, %p138
      %p140 = scmp.ne.s32.totalorder %s131, %s132
      %p141 = scmp.eq.s32.totalorder %s21, 0
      %p142 = por %p140, %p141
      %p143 = scmp.ne.s32.totalorder %s131, %s132
      %p144 = scmp.eq.s32.totalorder %s22, 1
      %p145 = por %p143, %p144
      %p147 = scmp.ne.s32.totalorder %s132, %s146
      %p148 = scmp.eq.s32.totalorder %s22, 0
      %p149 = por %p147, %p148
      %s151 = sadd.s32 %s150, 1
      %p154 = scmp.eq.s32.totalorder %s16, 1
      %p155 = scmp.ne.s32.totalorder %s150, %s152
      %p156 = scmp.eq.s32.totalorder %s16, 0
      %p157 = por %p155, %p156
      %p158 = scmp.ne.s32.totalorder %s150, %s152
      %p159 = scmp.eq.s32.totalorder %s21, 1
      %p160 = por %p158, %p159
      %p161 = scmp.ne.s32.totalorder %s152, %s153
      %p162 = scmp.eq.s32.totalorder %s21, 0
      %p163 = por %p161, %p162
      %p164 = scmp.ne.s32.totalorder %s152, %s153
      %p165 = scmp.eq.s32.totalorder %s22, 1
      %p166 = por %p164, %p165
      %p168 = scmp.ne.s32.totalorder %s153, %s167
      %p169 = scmp.eq.s32.totalorder %s22, 0
      %p170 = por %p168, %p169
      %s172 = sadd.s32 %s171, 1
      %p175 = scmp.eq.s32.totalorder %s16, 1
      %p176 = scmp.ne.s32.totalorder %s171, %s173
      %p177 = scmp.eq.s32.totalorder %s16, 0
      %p178 = por %p176, %p177
      %p179 = scmp.ne.s32.totalorder %s171, %s173
      %p180 = scmp.eq.s32.totalorder %s21, 1
      %p181 = por %p179, %p180
      %p182 = scmp.ne.s32.totalorder %s173, %s174
      %p183 = scmp.eq.s32.totalorder %s21, 0
      %p184 = por %p182, %p183
      %p185 = scmp.ne.s32.totalorder %s173, %s174
      %p186 = scmp.eq.s32.totalorder %s22, 1
      %p187 = por %p185, %p186
      %p189 = scmp.ne.s32.totalorder %s174, %s188
      %p190 = scmp.eq.s32.totalorder %s22, 0
      %p191 = por %p189, %p190
      %s192 = smul.u32 %s24, %s23
      %s193 = smul.u32 %s31, %s35
      %s194 = ssub.s32 %s192, %s193
      %p195 = scmp.eq.s32.totalorder %s194, 0
      %s197 = sadd.s32 %s196, 1
      %s198 = scalar_select %p195, %s196, %s197
      %p201 = pneg %p195
      %p202 = scmp.eq.s32.totalorder %s16, 1
      %p203 = por %p201, %p202
      %p204 = scmp.ne.s32.totalorder %s196, %s199
      %p205 = scmp.eq.s32.totalorder %s16, 0
      %p206 = por %p204, %p205
      %p207 = scmp.ne.s32.totalorder %s196, %s199
      %p208 = scmp.eq.s32.totalorder %s21, 1
      %p209 = por %p207, %p208
      %p210 = scmp.ne.s32.totalorder %s199, %s200
      %p211 = scmp.eq.s32.totalorder %s21, 0
      %p212 = por %p210, %p211
      %p213 = scmp.ne.s32.totalorder %s199, %s200
      %p214 = scmp.eq.s32.totalorder %s22, 1
      %p215 = por %p213, %p214
      %p217 = scmp.ne.s32.totalorder %s200, %s216
      %p218 = scmp.eq.s32.totalorder %s22, 0
      %p219 = por %p217, %p218
      %p220 = scmp.le.s32.totalorder 1, %s16
      %p221 = scmp.lt.s32.totalorder %s16, 3
      %p222 = pnand %p220, %p221
      %p223 = pneg %p222
      // Predicated region
      $region9: #{feedback_forward.1} parent=5 // pred_check
        _
      $region10: #{feedback_forward.1} parent=5 // pred_check_branch
        %225 = sbr.rel (%p222) target = $region12
      $region11: #{feedback_forward.1} parent=5 // pred_region
        %s226 = ssub.s32 %s16, 1
        // Predicated region
        $region13: #{feedback_forward.1} parent=11 // pred_check
          %p227 = pneg %p79
        $region14: #{feedback_forward.1} parent=11 // pred_check_branch
          %229 = sbr.rel (%p227) target = $region16
        $region15: #{feedback_forward.1} parent=11 // pred_region
          _
        $region16: #{feedback_forward.1} parent=11 // pred_fallthru
          _
        // Predicated region
        $region17: #{feedback_forward.1} parent=11 // pred_check
          %p230 = pneg %p100
        $region18: #{feedback_forward.1} parent=11 // pred_check_branch
          %232 = sbr.rel (%p230) target = $region20
        $region19: #{feedback_forward.1} parent=11 // pred_region
          _
        $region20: #{feedback_forward.1} parent=11 // pred_fallthru
          _
        // Predicated region
        $region21: #{feedback_forward.1} parent=11 // pred_check
          %p233 = pneg %p121
        $region22: #{feedback_forward.1} parent=11 // pred_check_branch
          %235 = sbr.rel (%p233) target = $region24
        $region23: #{feedback_forward.1} parent=11 // pred_region
          _
        $region24: #{feedback_forward.1} parent=11 // pred_fallthru
          _
        // Predicated region
        $region25: #{feedback_forward.1} parent=11 // pred_check
          %p236 = pneg %p142
        $region26: #{feedback_forward.1} parent=11 // pred_check_branch
          %238 = sbr.rel (%p236) target = $region28
        $region27: #{feedback_forward.1} parent=11 // pred_region
          _
        $region28: #{feedback_forward.1} parent=11 // pred_fallthru
          _
        // Predicated region
        $region29: #{feedback_forward.1} parent=11 // pred_check
          %p239 = pneg %p163
        $region30: #{feedback_forward.1} parent=11 // pred_check_branch
          %241 = sbr.rel (%p239) target = $region32
        $region31: #{feedback_forward.1} parent=11 // pred_region
          _
        $region32: #{feedback_forward.1} parent=11 // pred_fallthru
          _
        // Predicated region
        $region33: #{feedback_forward.1} parent=11 // pred_check
          %p242 = pneg %p184
        $region34: #{feedback_forward.1} parent=11 // pred_check_branch
          %244 = sbr.rel (%p242) target = $region36
        $region35: #{feedback_forward.1} parent=11 // pred_region
          _
        $region36: #{feedback_forward.1} parent=11 // pred_fallthru
          _
      $region12: #{feedback_forward.1} parent=5 // pred_fallthru
        _
      %p245 = scmp.lt.s32.totalorder %s16, 2
      // Predicated region
      $region37: #{feedback_forward.1} parent=5 // pred_check
        %p246 = pneg %p245
      $region38: #{feedback_forward.1} parent=5 // pred_check_branch
        %248 = sbr.rel (%p246) target = $region40
      $region39: #{feedback_forward.1} parent=5 // pred_region
        // Predicated region
        $region41: #{feedback_forward.1} parent=39 // pred_check
          %p249 = pneg %p52
        $region42: #{feedback_forward.1} parent=39 // pred_check_branch
          %251 = sbr.rel (%p249) target = $region44
        $region43: #{feedback_forward.1} parent=39 // pred_region
          %s252 = ssub.s32 1, %s23
          %s253 = smul.u32 %s24, %s252
          %s254 = smul.u32 2, %s253
          %p255 = scmp.lt.s32.totalorder %s254, 1
          %s256 = scalar_select %p255, %s254, 1
          %s257 = smul.addr %s256, 8
          %s258 = scalar_lea.vmem %s0, %s257
          %s259 = ssub.s32 1, %s23
          %s260 = smul.u32 %s24, %s259
          %s261 = smul.u32 2, %s260
        $region44: #{feedback_forward.1} parent=39 // pred_fallthru
          _
      $region40: #{feedback_forward.1} parent=5 // pred_fallthru
        _
      %p262 = scmp.le.s32.totalorder 1, %s16
      %p263 = scmp.lt.s32.totalorder %s16, 3
      %p264 = pnand %p262, %p263
      %p265 = pneg %p264
      // Predicated region
      $region45: #{feedback_forward.1} parent=5 // pred_check
        _
      $region46: #{feedback_forward.1} parent=5 // pred_check_branch
        %267 = sbr.rel (%p264) target = $region48
      $region47: #{feedback_forward.1} parent=5 // pred_region
        %s268 = ssub.s32 %s16, 1
        %s269 = ssub.s32 1, %s25
        %s270 = smul.u32 %s26, %s269
        %s271 = smul.u32 2, %s270
        %p272 = scmp.lt.s32.totalorder %s271, 1
        %s273 = scalar_select %p272, %s271, 1
        %s274 = smul.addr %s273, 8
        %s275 = scalar_lea.vmem %s0, %s274
        %p276 = pneg %p58
        %p277 = pneg %p55
        %p278 = pneg %p79
        %p279 = pneg %p76
        %p280 = pneg %p100
        %p281 = pneg %p97
        %p282 = pneg %p121
        %p283 = pneg %p118
        %p284 = pneg %p142
        %p285 = pneg %p139
        %p286 = pneg %p163
        %p287 = pneg %p160
        %p288 = pneg %p184
        %p289 = pneg %p181
        %p290 = pneg %p212
        %p291 = pneg %p209
        %s292 = sand.u32 %s199, 1
        %s293 = scalar_lea.sflag [#allocation8], %s292
        %s294 = sand.u32 %s199, 1
        %s295 = smul.addr %s294, 16
        %s296 = scalar_lea.vmem [#allocation7], %s295
        %s297 = ssub.s32 1, %s25
        %s298 = smul.u32 %s26, %s297
        %s299 = smul.u32 2, %s298
        %p300 = scmp.lt.s32.totalorder %s299, 1
        %s301 = scalar_select %p300, %s299, 1
        %s302 = smul.addr %s301, 8
        %s303 = scalar_lea.vmem %s0, %s302
        %s304 = ssub.s32 1, %s25
        %s305 = smul.u32 %s26, %s304
        %s306 = smul.u32 2, %s305
        %s307 = smul.u32 %s26, %s25
        %s308 = smul.u32 2, %s307
        %p309 = scmp.eq.s32.totalorder %s25, 0
        // Predicated region
        $region49: #{feedback_forward.1} parent=47 // pred_check
          %p310 = pneg %p309
        $region50: #{feedback_forward.1} parent=47 // pred_check_branch
          %312 = sbr.rel (%p310) target = $region52
        $region51: #{feedback_forward.1} parent=47 // pred_region
          %p313 = scmp.eq.s32.totalorder %s26, 0
          // Predicated region
          $region53: #{feedback_forward.1} parent=51 // pred_check
            %p314 = pneg %p313
          $region54: #{feedback_forward.1} parent=51 // pred_check_branch
            %316 = sbr.rel (%p314) target = $region56
          $region55: #{feedback_forward.1} parent=51 // pred_region
            %317 = vst [vmem:[#allocation2] sm:$0x1] 0.0
            %318 = vst [vmem:[#allocation3] sm:$0x1] 0.0
          $region56: #{feedback_forward.1} parent=51 // pred_fallthru
            _
          %v319 = vld [vmem:[%s303] sm:$0xff]
          %v320 = vld [vmem:[%s303 + $0x8] sm:$0xff]
          %v321 = vld [vmem:[%s1] sm:$0xff]
          %v322 = vld [vmem:[%s1 + $0x8] sm:$0xff]
          %v323 = vld [vmem:[%s1 + $0x10] sm:$0xff]
          %v324 = vld [vmem:[%s1 + $0x18] sm:$0xff]
          %v325 = vld [vmem:[%s1 + $0x20] sm:$0xff]
          %v326 = vld [vmem:[%s1 + $0x28] sm:$0xff]
          %v327 = vld [vmem:[%s1 + $0x30] sm:$0xff]
          %v328 = vld [vmem:[%s1 + $0x38] sm:$0xff]
          %v329 = vld [vmem:[%s1 + $0x40] sm:$0xff]
          %v330 = vld [vmem:[%s1 + $0x48] sm:$0xff]
          %v331 = vld [vmem:[%s1 + $0x50] sm:$0xff]
          %v332 = vld [vmem:[%s1 + $0x58] sm:$0xff]
          %v333 = vld [vmem:[%s1 + $0x60] sm:$0xff]
          %v334 = vld [vmem:[%s1 + $0x68] sm:$0xff]
          %v335 = vld [vmem:[%s1 + $0x70] sm:$0xff]
          %v336 = vld [vmem:[%s1 + $0x78] sm:$0xff]
          %v337 = vld [vmem:[%s2] sm:$0x1]
          %v339 = vlaneseq
          %v340 = vshrl.u32 %v339, 7
          %v341 = vsub.s32 0, %v340
          %v342 = vrot.slane %v337, %v341
          %344 = vmatprep.subr.mxu0 0.0
          %345 = vmatpush1.msra.mxu0 %v336
          %346 = vmatprep.subr.mxu0 0.0
          %347 = vmatpush1.msra.mxu0 %v335
          %348 = vmatprep.subr.mxu0 0.0
          %349 = vmatpush1.msra.mxu0 %v334
          %350 = vmatprep.subr.mxu0 0.0
          %351 = vmatpush1.msra.mxu0 %v333
          %352 = vmatprep.subr.mxu0 0.0
          %353 = vmatpush1.msra.mxu0 %v332
          %354 = vmatprep.subr.mxu0 0.0
          %355 = vmatpush1.msra.mxu0 %v331
          %356 = vmatprep.subr.mxu0 0.0
          %357 = vmatpush1.msra.mxu0 %v330
          %358 = vmatprep.subr.mxu0 0.0
          %359 = vmatpush1.msra.mxu0 %v329
          %360 = vmatprep.subr.mxu0 0.0
          %361 = vmatpush1.msra.mxu0 %v328
          %362 = vmatprep.subr.mxu0 0.0
          %363 = vmatpush1.msra.mxu0 %v327
          %364 = vmatprep.subr.mxu0 0.0
          %365 = vmatpush1.msra.mxu0 %v326
          %366 = vmatprep.subr.mxu0 0.0
          %367 = vmatpush1.msra.mxu0 %v325
          %368 = vmatprep.subr.mxu0 0.0
          %369 = vmatpush1.msra.mxu0 %v324
          %370 = vmatprep.subr.mxu0 0.0
          %371 = vmatpush1.msra.mxu0 %v323
          %372 = vmatprep.subr.mxu0 0.0
          %373 = vmatpush1.msra.mxu0 %v322
          %374 = vmatprep.subr.mxu0 0.0
          %375 = vmatpush1.msra.mxu0 %v321
          %376 = vmatprep.subr.mxu0 0.0
          %377 = vmatpush2.msra.mxu0 0.0
          %378 = vmatprep.subr.mxu0 0.0
          %379 = vmatpush2.msra.mxu0 0.0
          %380 = vmatprep.subr.mxu0 0.0
          %381 = vmatpush2.msra.mxu0 0.0
          %382 = vmatprep.subr.mxu0 0.0
          %383 = vmatpush2.msra.mxu0 0.0
          %384 = vmatprep.subr.mxu0 0.0
          %385 = vmatpush2.msra.mxu0 0.0
          %386 = vmatprep.subr.mxu0 0.0
          %387 = vmatpush2.msra.mxu0 0.0
          %388 = vmatprep.subr.mxu0 0.0
          %389 = vmatpush2.msra.mxu0 0.0
          %390 = vmatprep.subr.mxu0 0.0
          %391 = vmatpush2.msra.mxu0 0.0
          %392 = vmatprep.subr.mxu0 0.0
          %393 = vmatpush2.msra.mxu0 0.0
          %394 = vmatprep.subr.mxu0 0.0
          %395 = vmatpush2.msra.mxu0 0.0
          %396 = vmatprep.subr.mxu0 0.0
          %397 = vmatpush2.msra.mxu0 0.0
          %398 = vmatprep.subr.mxu0 0.0
          %399 = vmatpush2.msra.mxu0 0.0
          %400 = vmatprep.subr.mxu0 0.0
          %401 = vmatpush2.msra.mxu0 0.0
          %402 = vmatprep.subr.mxu0 0.0
          %403 = vmatpush2.msra.mxu0 0.0
          %404 = vmatprep.subr.mxu0 0.0
          %405 = vmatpush2.msra.mxu0 0.0
          %406 = vmatprep.subr.mxu0 0.0
          %407 = vmatpush2.msra.mxu0 0.0
          %408 = vmatprep.mubr.f32.mxu0 0.0
          %409 = vmatmul.mubr.f32.gmra.mxu0 %v319
          %v410 = vpop.f32.mrf.mxu0
          %v411 = vadd.f32 %v342, %v410
          %v412 = vpop.f32.mrf.mxu0
          %413 = vmatprep.mubr.f32.mxu0 0.0
          %414 = vmatmul.mubr.f32.gmra.mxu0 %v320
          %v415 = vpop.f32.mrf.mxu0
          %v416 = vadd.f32 %v342, %v415
          %v417 = vpop.f32.mrf.mxu0
          %418 = vdwg.mxu0
          %v419 = vmul.f32 %v411, 0.5
          %v420 = vmul.f32 %v416, 0.5
          %v421 = vmul.f32 %v411, 0.70710677
          %v422 = vmul.f32 %v416, 0.70710677
          %v423 = vand.u32 2147483647, %v421
          %v424 = vand.u32 2147483647, %v422
          %v425 = vmul.f32 %v423, 0.3275911
          %v426 = vmul.f32 %v424, 0.3275911
          %v427 = vadd.f32 %v425, 1.0
          %v428 = vadd.f32 %v426, 1.0
          %v429 = vrcp.pop %v427
          %v430 = vmul.f32 1.0, %v429
          %v431 = vrcp.pop %v428
          %v432 = vmul.f32 1.0, %v431
          %v433 = vmul.f32 %v430, 1.0614054
          %v434 = vmul.f32 %v432, 1.0614054
          %v435 = vadd.f32 %v433, -1.4531521
          %v436 = vadd.f32 %v434, -1.4531521
          %v437 = vmul.f32 %v435, %v430
          %v438 = vmul.f32 %v436, %v432
          %v439 = vadd.f32 %v437, 1.4214138
          %v440 = vadd.f32 %v438, 1.4214138
          %v441 = vmul.f32 %v439, %v430
          %v442 = vmul.f32 %v440, %v432
          %v443 = vadd.f32 %v441, -0.28449672
          %v444 = vadd.f32 %v442, -0.28449672
          %v445 = vmul.f32 %v443, %v430
          %v446 = vmul.f32 %v444, %v432
          %v447 = vadd.f32 %v445, 0.2548296
          %v448 = vadd.f32 %v446, 0.2548296
          %v449 = vmul.f32 %v447, %v430
          %v450 = vmul.f32 %v448, %v432
          %v451 = vsub.f32 0.0, %v423
          %v452 = vsub.f32 0.0, %v424
          %v453 = vmul.f32 %v451, %v423
          %v454 = vmul.f32 %v452, %v424
          %v455 = vmul.f32 %v453, 1.442695
          %v456 = vpow.pop %v455
          %v457 = vmul.f32 %v454, 1.442695
          %v458 = vpow.pop %v457
          %v459 = vmul.f32 %v449, %v456
          %v460 = vmul.f32 %v450, %v458
          %v461 = vsub.f32 1.0, %v459
          %v462 = vsub.f32 1.0, %v460
          %vm463 = vcmp.lt.f32.partialorder %v421, 0.0
          %vm464 = vcmp.lt.f32.partialorder %v422, 0.0
          %v465 = vsub.f32 0.0, %v461
          %v466 = vsub.f32 0.0, %v462
          %v467 = vsel %vm463, %v465, %v461
          %v468 = vsel %vm464, %v466, %v462
          %v469 = vadd.f32 %v467, 1.0
          %v470 = vadd.f32 %v468, 1.0
          %v471 = vmul.f32 %v419, %v469
          %v472 = vmul.f32 %v420, %v470
          %s473 = smul.u32 %s26, 16
          %s474 = scalar_lea.vmem [#allocation6], %s473
          %475 = vst [vmem:[%s474] sm:$0xff] %v471
          %476 = vst [vmem:[%s474 + $0x8] sm:$0xff] %v472
          %v477 = vld [vmem:[#allocation2] sm:$0x1]
          %v478 = vadd.f32 %v471, %v472
          %v479 = vrot.slane %v478, 4
          %v480 = vadd.f32 %v478, %v479
          %v481 = vrot.slane %v480, 2
          %v482 = vadd.f32 %v480, %v481
          %v483 = vrot.slane %v482, 1
          %v484 = vadd.f32 %v482, %v483
          %v485 = vadd.f32 %v477, %v484
          %486 = vst [vmem:[#allocation2] sm:$0x1] %v485
          %v487 = vld [vmem:[#allocation3] sm:$0x1]
          %v488 = vmul.f32 %v471, %v471
          %v489 = vmul.f32 %v472, %v472
          %v490 = vadd.f32 %v488, %v489
          %v491 = vrot.slane %v490, 4
          %v492 = vadd.f32 %v490, %v491
          %v493 = vrot.slane %v492, 2
          %v494 = vadd.f32 %v492, %v493
          %v495 = vrot.slane %v494, 1
          %v496 = vadd.f32 %v494, %v495
          %v497 = vadd.f32 %v487, %v496
          %498 = vst [vmem:[#allocation3] sm:$0x1] %v497
        $region52: #{feedback_forward.1} parent=47 // pred_fallthru
          _
        %p499 = scmp.eq.s32.totalorder %s25, 1
        // Predicated region
        $region57: #{feedback_forward.1} parent=47 // pred_check
          %p500 = pneg %p499
        $region58: #{feedback_forward.1} parent=47 // pred_check_branch
          %502 = sbr.rel (%p500) target = $region60
        $region59: #{feedback_forward.1} parent=47 // pred_region
          %p503 = scmp.eq.s32.totalorder %s26, 0
          // Predicated region
          $region61: #{feedback_forward.1} parent=59 // pred_check
            %p504 = pneg %p503
          $region62: #{feedback_forward.1} parent=59 // pred_check_branch
            %506 = sbr.rel (%p504) target = $region64
          $region63: #{feedback_forward.1} parent=59 // pred_region
            %v507 = vld [vmem:[#allocation2] sm:$0x1]
            %v508 = vmul.f32 %v507, 0.0625
            %v509 = vld [vmem:[#allocation3] sm:$0x1]
            %v510 = vmul.f32 %v509, 0.0625
            %v511 = vmul.f32 %v508, %v508
            %v512 = vsub.f32 %v510, %v511
            %v513 = vmax.f32 %v512, 0.0
            %v514 = vadd.f32 %v513, 1e-05
            %v515 = vrsqrt.pop %v514
            %v516 = vld [vmem:[%s3] sm:$0x1]
            %v517 = vmul.f32 %v516, %v515
            %v518 = vld [vmem:[%s4] sm:$0x1]
            %v519 = vmul.f32 %v508, %v517
            %v520 = vsub.f32 %v518, %v519
            %v521 = vld [vmem:[%s5] sm:$0xff]
            %v522 = vld [vmem:[%s5 + $0x8] sm:$0xff]
            %v523 = vld [vmem:[%s5 + $0x10] sm:$0xff]
            %v524 = vld [vmem:[%s5 + $0x18] sm:$0xff]
            %v525 = vld [vmem:[%s5 + $0x20] sm:$0xff]
            %v526 = vld [vmem:[%s5 + $0x28] sm:$0xff]
            %v527 = vld [vmem:[%s5 + $0x30] sm:$0xff]
            %v528 = vld [vmem:[%s5 + $0x38] sm:$0xff]
            %v529 = vld [vmem:[%s5 + $0x40] sm:$0xff]
            %v530 = vld [vmem:[%s5 + $0x48] sm:$0xff]
            %v531 = vld [vmem:[%s5 + $0x50] sm:$0xff]
            %v532 = vld [vmem:[%s5 + $0x58] sm:$0xff]
            %v533 = vld [vmem:[%s5 + $0x60] sm:$0xff]
            %v534 = vld [vmem:[%s5 + $0x68] sm:$0xff]
            %v535 = vld [vmem:[%s5 + $0x70] sm:$0xff]
            %v536 = vld [vmem:[%s5 + $0x78] sm:$0xff]
            %v538 = vlaneseq
            %v539 = vshrl.u32 %v538, 7
            %v540 = vsub.s32 0, %v539
            %v541 = vrot.slane %v517, %v540
            %v543 = vmul.f32 %v521, %v541
            %v544 = vmul.f32 %v522, %v541
            %v545 = vmul.f32 %v523, %v541
            %v546 = vmul.f32 %v524, %v541
            %v547 = vmul.f32 %v525, %v541
            %v548 = vmul.f32 %v526, %v541
            %v549 = vmul.f32 %v527, %v541
            %v550 = vmul.f32 %v528, %v541
            %v551 = vmul.f32 %v529, %v541
            %v552 = vmul.f32 %v530, %v541
            %v553 = vmul.f32 %v531, %v541
            %v554 = vmul.f32 %v532, %v541
            %v555 = vmul.f32 %v533, %v541
            %v556 = vmul.f32 %v534, %v541
            %v557 = vmul.f32 %v535, %v541
            %v558 = vmul.f32 %v536, %v541
            %559 = vst [vmem:[#allocation5] sm:$0xff] %v543
            %560 = vst [vmem:[#allocation5 + $0x8] sm:$0xff] %v544
            %561 = vst [vmem:[#allocation5 + $0x10] sm:$0xff] %v545
            %562 = vst [vmem:[#allocation5 + $0x18] sm:$0xff] %v546
            %563 = vst [vmem:[#allocation5 + $0x20] sm:$0xff] %v547
            %564 = vst [vmem:[#allocation5 + $0x28] sm:$0xff] %v548
            %565 = vst [vmem:[#allocation5 + $0x30] sm:$0xff] %v549
            %566 = vst [vmem:[#allocation5 + $0x38] sm:$0xff] %v550
            %567 = vst [vmem:[#allocation5 + $0x40] sm:$0xff] %v551
            %568 = vst [vmem:[#allocation5 + $0x48] sm:$0xff] %v552
            %569 = vst [vmem:[#allocation5 + $0x50] sm:$0xff] %v553
            %570 = vst [vmem:[#allocation5 + $0x58] sm:$0xff] %v554
            %571 = vst [vmem:[#allocation5 + $0x60] sm:$0xff] %v555
            %572 = vst [vmem:[#allocation5 + $0x68] sm:$0xff] %v556
            %573 = vst [vmem:[#allocation5 + $0x70] sm:$0xff] %v557
            %574 = vst [vmem:[#allocation5 + $0x78] sm:$0xff] %v558
            %v576 = vlaneseq
            %v577 = vshrl.u32 %v576, 7
            %v578 = vsub.s32 0, %v577
            %v579 = vrot.slane %v520, %v578
            %581 = vmatprep.subr.mxu0 0.0
            %582 = vmatpush1.xpose.msra.mxu0 %v536
            %583 = vmatprep.subr.mxu0 0.0
            %584 = vmatpush1.xpose.msra.mxu0 %v535
            %585 = vmatprep.subr.mxu0 0.0
            %586 = vmatpush1.xpose.msra.mxu0 %v534
            %587 = vmatprep.subr.mxu0 0.0
            %588 = vmatpush1.xpose.msra.mxu0 %v533
            %589 = vmatprep.subr.mxu0 0.0
            %590 = vmatpush1.xpose.msra.mxu0 %v532
            %591 = vmatprep.subr.mxu0 0.0
            %592 = vmatpush1.xpose.msra.mxu0 %v531
            %593 = vmatprep.subr.mxu0 0.0
            %594 = vmatpush1.xpose.msra.mxu0 %v530
            %595 = vmatprep.subr.mxu0 0.0
            %596 = vmatpush1.xpose.msra.mxu0 %v529
            %597 = vmatprep.subr.mxu0 0.0
            %598 = vmatpush1.xpose.msra.mxu0 %v528
            %599 = vmatprep.subr.mxu0 0.0
            %600 = vmatpush1.xpose.msra.mxu0 %v527
            %601 = vmatprep.subr.mxu0 0.0
            %602 = vmatpush1.xpose.msra.mxu0 %v526
            %603 = vmatprep.subr.mxu0 0.0
            %604 = vmatpush1.xpose.msra.mxu0 %v525
            %605 = vmatprep.subr.mxu0 0.0
            %606 = vmatpush1.xpose.msra.mxu0 %v524
            %607 = vmatprep.subr.mxu0 0.0
            %608 = vmatpush1.xpose.msra.mxu0 %v523
            %609 = vmatprep.subr.mxu0 0.0
            %610 = vmatpush1.xpose.msra.mxu0 %v522
            %611 = vmatprep.subr.mxu0 0.0
            %612 = vmatpush1.xpose.msra.mxu0 %v521
            %613 = vmatprep.subr.mxu0 0.0
            %614 = vmatpush2.xpose.msra.mxu0 0.0
            %615 = vmatprep.subr.mxu0 0.0
            %616 = vmatpush2.xpose.msra.mxu0 0.0
            %617 = vmatprep.subr.mxu0 0.0
            %618 = vmatpush2.xpose.msra.mxu0 0.0
            %619 = vmatprep.subr.mxu0 0.0
            %620 = vmatpush2.xpose.msra.mxu0 0.0
            %621 = vmatprep.subr.mxu0 0.0
            %622 = vmatpush2.xpose.msra.mxu0 0.0
            %623 = vmatprep.subr.mxu0 0.0
            %624 = vmatpush2.xpose.msra.mxu0 0.0
            %625 = vmatprep.subr.mxu0 0.0
            %626 = vmatpush2.xpose.msra.mxu0 0.0
            %627 = vmatprep.subr.mxu0 0.0
            %628 = vmatpush2.xpose.msra.mxu0 0.0
            %629 = vmatprep.subr.mxu0 0.0
            %630 = vmatpush2.xpose.msra.mxu0 0.0
            %631 = vmatprep.subr.mxu0 0.0
            %632 = vmatpush2.xpose.msra.mxu0 0.0
            %633 = vmatprep.subr.mxu0 0.0
            %634 = vmatpush2.xpose.msra.mxu0 0.0
            %635 = vmatprep.subr.mxu0 0.0
            %636 = vmatpush2.xpose.msra.mxu0 0.0
            %637 = vmatprep.subr.mxu0 0.0
            %638 = vmatpush2.xpose.msra.mxu0 0.0
            %639 = vmatprep.subr.mxu0 0.0
            %640 = vmatpush2.xpose.msra.mxu0 0.0
            %641 = vmatprep.subr.mxu0 0.0
            %642 = vmatpush2.xpose.msra.mxu0 0.0
            %643 = vmatprep.subr.mxu0 0.0
            %644 = vmatpush2.xpose.msra.mxu0 0.0
            %645 = vmatprep.mubr.f32.mxu0 0.0
            %646 = vmatmul.mubr.f32.gmra.mxu0 %v579
            %v647 = vpop.f32.mrf.mxu0
            %v648 = vadd.f32 0.0, %v647
            %v649 = vpop.f32.mrf.mxu0
            %650 = vdwg.mxu0
            %v651 = vld [vmem:[%s6] sm:$0x1]
            %v652 = vadd.f32 %v648, %v651
            %653 = vst [vmem:[#allocation4] sm:$0x1] %v652
          $region64: #{feedback_forward.1} parent=59 // pred_fallthru
            _
          %s654 = smul.u32 %s26, 16
          %s655 = scalar_lea.vmem [#allocation6], %s654
          %v656 = vld [vmem:[%s655] sm:$0xff]
          %v657 = vld [vmem:[%s655 + $0x8] sm:$0xff]
          %v658 = vld [vmem:[#allocation5] sm:$0xff]
          %v659 = vld [vmem:[#allocation5 + $0x8] sm:$0xff]
          %v660 = vld [vmem:[#allocation5 + $0x10] sm:$0xff]
          %v661 = vld [vmem:[#allocation5 + $0x18] sm:$0xff]
          %v662 = vld [vmem:[#allocation5 + $0x20] sm:$0xff]
          %v663 = vld [vmem:[#allocation5 + $0x28] sm:$0xff]
          %v664 = vld [vmem:[#allocation5 + $0x30] sm:$0xff]
          %v665 = vld [vmem:[#allocation5 + $0x38] sm:$0xff]
          %v666 = vld [vmem:[#allocation5 + $0x40] sm:$0xff]
          %v667 = vld [vmem:[#allocation5 + $0x48] sm:$0xff]
          %v668 = vld [vmem:[#allocation5 + $0x50] sm:$0xff]
          %v669 = vld [vmem:[#allocation5 + $0x58] sm:$0xff]
          %v670 = vld [vmem:[#allocation5 + $0x60] sm:$0xff]
          %v671 = vld [vmem:[#allocation5 + $0x68] sm:$0xff]
          %v672 = vld [vmem:[#allocation5 + $0x70] sm:$0xff]
          %v673 = vld [vmem:[#allocation5 + $0x78] sm:$0xff]
          %v674 = vld [vmem:[#allocation4] sm:$0x1]
          %v676 = vlaneseq
          %v677 = vshrl.u32 %v676, 7
          %v678 = vsub.s32 0, %v677
          %v679 = vrot.slane %v674, %v678
          %681 = vmatprep.subr.mxu0 0.0
          %682 = vmatpush1.xpose.msra.mxu0 %v673
          %683 = vmatprep.subr.mxu0 0.0
          %684 = vmatpush1.xpose.msra.mxu0 %v672
          %685 = vmatprep.subr.mxu0 0.0
          %686 = vmatpush1.xpose.msra.mxu0 %v671
          %687 = vmatprep.subr.mxu0 0.0
          %688 = vmatpush1.xpose.msra.mxu0 %v670
          %689 = vmatprep.subr.mxu0 0.0
          %690 = vmatpush1.xpose.msra.mxu0 %v669
          %691 = vmatprep.subr.mxu0 0.0
          %692 = vmatpush1.xpose.msra.mxu0 %v668
          %693 = vmatprep.subr.mxu0 0.0
          %694 = vmatpush1.xpose.msra.mxu0 %v667
          %695 = vmatprep.subr.mxu0 0.0
          %696 = vmatpush1.xpose.msra.mxu0 %v666
          %697 = vmatprep.subr.mxu0 0.0
          %698 = vmatpush1.xpose.msra.mxu0 %v665
          %699 = vmatprep.subr.mxu0 0.0
          %700 = vmatpush1.xpose.msra.mxu0 %v664
          %701 = vmatprep.subr.mxu0 0.0
          %702 = vmatpush1.xpose.msra.mxu0 %v663
          %703 = vmatprep.subr.mxu0 0.0
          %704 = vmatpush1.xpose.msra.mxu0 %v662
          %705 = vmatprep.subr.mxu0 0.0
          %706 = vmatpush1.xpose.msra.mxu0 %v661
          %707 = vmatprep.subr.mxu0 0.0
          %708 = vmatpush1.xpose.msra.mxu0 %v660
          %709 = vmatprep.subr.mxu0 0.0
          %710 = vmatpush1.xpose.msra.mxu0 %v659
          %711 = vmatprep.subr.mxu0 0.0
          %712 = vmatpush1.xpose.msra.mxu0 %v658
          %713 = vmatprep.subr.mxu0 0.0
          %714 = vmatpush2.xpose.msra.mxu0 0.0
          %715 = vmatprep.subr.mxu0 0.0
          %716 = vmatpush2.xpose.msra.mxu0 0.0
          %717 = vmatprep.subr.mxu0 0.0
          %718 = vmatpush2.xpose.msra.mxu0 0.0
          %719 = vmatprep.subr.mxu0 0.0
          %720 = vmatpush2.xpose.msra.mxu0 0.0
          %721 = vmatprep.subr.mxu0 0.0
          %722 = vmatpush2.xpose.msra.mxu0 0.0
          %723 = vmatprep.subr.mxu0 0.0
          %724 = vmatpush2.xpose.msra.mxu0 0.0
          %725 = vmatprep.subr.mxu0 0.0
          %726 = vmatpush2.xpose.msra.mxu0 0.0
          %727 = vmatprep.subr.mxu0 0.0
          %728 = vmatpush2.xpose.msra.mxu0 0.0
          %729 = vmatprep.subr.mxu0 0.0
          %730 = vmatpush2.xpose.msra.mxu0 0.0
          %731 = vmatprep.subr.mxu0 0.0
          %732 = vmatpush2.xpose.msra.mxu0 0.0
          %733 = vmatprep.subr.mxu0 0.0
          %734 = vmatpush2.xpose.msra.mxu0 0.0
          %735 = vmatprep.subr.mxu0 0.0
          %736 = vmatpush2.xpose.msra.mxu0 0.0
          %737 = vmatprep.subr.mxu0 0.0
          %738 = vmatpush2.xpose.msra.mxu0 0.0
          %739 = vmatprep.subr.mxu0 0.0
          %740 = vmatpush2.xpose.msra.mxu0 0.0
          %741 = vmatprep.subr.mxu0 0.0
          %742 = vmatpush2.xpose.msra.mxu0 0.0
          %743 = vmatprep.subr.mxu0 0.0
          %744 = vmatpush2.xpose.msra.mxu0 0.0
          %745 = vmatprep.mubr.f32.mxu0 0.0
          %746 = vmatmul.mubr.f32.gmra.mxu0 %v656
          %v747 = vpop.f32.mrf.mxu0
          %v748 = vadd.f32 %v679, %v747
          %v749 = vpop.f32.mrf.mxu0
          %750 = vmatprep.mubr.f32.mxu0 0.0
          %751 = vmatmul.mubr.f32.gmra.mxu0 %v657
          %v752 = vpop.f32.mrf.mxu0
          %v753 = vadd.f32 %v679, %v752
          %v754 = vpop.f32.mrf.mxu0
          %755 = vdwg.mxu0
          %756 = vst [vmem:[%s296] sm:$0xff] %v748
          %757 = vst [vmem:[%s296 + $0x8] sm:$0xff] %v753
        $region60: #{feedback_forward.1} parent=47 // pred_fallthru
          _
        %s758 = sand.u32 %s199, 1
        %s759 = scalar_lea.sflag [#allocation8], %s758
        %s760 = sand.u32 %s199, 1
        %s761 = smul.addr %s760, 16
        %s762 = scalar_lea.vmem [#allocation7], %s761
        // Predicated region
        $region65: #{feedback_forward.1} parent=47 // pred_check
          %p763 = pneg %p209
        $region66: #{feedback_forward.1} parent=47 // pred_check_branch
          %765 = sbr.rel (%p763) target = $region68
        $region67: #{feedback_forward.1} parent=47 // pred_region
          %s766 = smul.u32 %s26, %s25
          %s767 = smul.u32 2, %s766
          %s769 = ssub.s32 256, 256
          %770 = vsyncadd %s759, %s769
          %s771 = smul.addr %s767, 128
          %s772 = scalar_lea.hbm %s7, %s771
          %s773 = sshll.u32 %s762, 4
          %s774 = int_to_ptr.vmem [resolvable:$true] %s773
          %779 = dma.vmem_to_hbm [thread:$0]  %s774, 256, %s772, %s759, 128, 128, 8
        $region68: #{feedback_forward.1} parent=47 // pred_fallthru
          _
      $region48: #{feedback_forward.1} parent=5 // pred_fallthru
        _
      %p780 = scmp.le.s32.totalorder 2, %s16
      // Predicated region
      $region69: #{feedback_forward.1} parent=5 // pred_check
        %p781 = pneg %p780
      $region70: #{feedback_forward.1} parent=5 // pred_check_branch
        %783 = sbr.rel (%p781) target = $region72
      $region71: #{feedback_forward.1} parent=5 // pred_region
        %s784 = ssub.s32 %s16, 2
        // Predicated region
        $region73: #{feedback_forward.1} parent=71 // pred_check
          %p785 = pneg %p215
        $region74: #{feedback_forward.1} parent=71 // pred_check_branch
          %787 = sbr.rel (%p785) target = $region76
        $region75: #{feedback_forward.1} parent=71 // pred_region
          %s788 = sand.u32 %s200, 1
          %s789 = scalar_lea.sflag [#allocation8], %s788
          %s790 = sand.u32 %s200, 1
          %s791 = smul.addr %s790, 16
          %s792 = scalar_lea.vmem [#allocation7], %s791
          %793 = dma.done %s789, 256
        $region76: #{feedback_forward.1} parent=71 // pred_fallthru
          _
      $region72: #{feedback_forward.1} parent=5 // pred_fallthru
        _
    $region6: #{feedback_forward.1} parent=1 // loop_footer
      %s20 = sadd.s32 1, %s16
    $region7: #{feedback_forward.1} parent=1 // loop_footer_branch
      %15 = sbr.rel target = $region3
    $region8: #{feedback_forward.1} parent=1 // loop_exit
      _
    %794 = vsyncpa [#allocation8], 1
    %s795 = scalar_lea.sflag [#allocation8], 1
    %796 = vsyncpa %s795, 1

// kernel: feedback_forward.1
$region0: #{feedback_forward.1}
  #allocation0 [shape = 'u32[]', space=smem, size = 0x4, offset = 0x4, fixed_abs, tag = 'smem constant byte address 0x4 - core index']
  #allocation1 [shape = 'u32[144,128]{1,0:T(1,128)}', space=vmem, size = 0x12000, scoped, tag = 'internal scratch']
  #allocation2 [shape = 'f32[1,128]{1,0:T(1,128)}', space=vmem, size = 0x200, scoped, tag = 'scratch operand']
  #allocation3 [shape = 'f32[1,128]{1,0:T(1,128)}', space=vmem, size = 0x200, scoped, tag = 'scratch operand']
  #allocation4 [shape = 'f32[1,128]{1,0:T(1,128)}', space=vmem, size = 0x200, scoped, tag = 'scratch operand']
  #allocation5 [shape = 'f32[128,128]{1,0:T(8,128)}', space=vmem, size = 0x10000, scoped, tag = 'scratch operand']
  #allocation6 [shape = 'f32[1,16,128]{2,1,0:T(8,128)}', space=vmem, size = 0x2000, scoped, tag = 'scratch operand']
  %s0 = inlined_call_operand.vmem [shape: f32[16,128], index: 0, kind: input, shape index: {}]
  %s1 = inlined_call_operand.vmem [shape: f32[128,128], index: 1, kind: input, shape index: {}]
  %s2 = inlined_call_operand.vmem [shape: f32[1,128], index: 2, kind: input, shape index: {}]
  %s3 = inlined_call_operand.vmem [shape: f32[1,128], index: 3, kind: input, shape index: {}]
  %s4 = inlined_call_operand.vmem [shape: f32[1,128], index: 4, kind: input, shape index: {}]
  %s5 = inlined_call_operand.vmem [shape: f32[128,128], index: 5, kind: input, shape index: {}]
  %s6 = inlined_call_operand.vmem [shape: f32[1,128], index: 6, kind: input, shape index: {}]
  %s7 = inlined_call_operand.hbm [shape: f32[16,128], index: 7, kind: output, shape index: {}]
  %s8 = sld [smem:[#allocation0]]
  $region77: #{feedback_forward.1} parent=0
    _
  %s10 = ssub.s32 1, %s8
  %s11 = scalar_select 0, %s10, %s8
  $region1: #{feedback_forward.1} parent=0
    #allocation7 [shape = 'u8[16384]{0}', space=vmem, size = 0x4000, scoped, tag = 'output window, operand 0']
    #allocation8 [shape = 's32[2]{0}', space=sflag, size = 0x8, scoped, tag = 'scoped memory for feedback_forward.1']
    %12 = vsyncpa [#allocation8], 0
    %s13 = scalar_lea.sflag [#allocation8], 1
    %14 = vsyncpa %s13, 0
    loop: start=0, step=1, limit=4
    $region2: #{feedback_forward.1} parent=1 // loop_pre_header
      _
    $region3: #{feedback_forward.1} parent=1 // loop_header
      %s16 = sphi 0, %s20
      %p17 = scmp.ge.s32.totalorder %s16, 4
      %s23 = sphi 0, %s35
      %s24 = sphi 0, %s31
      %s25 = sphi 0, %s23
      %s26 = sphi 0, %s24
      %s27 = sphi 0, %s25
      %s28 = sphi 0, %s26
      %s42 = sphi 0, %s44
      %s45 = sphi 0, %s42
      %s46 = sphi 0, %s45
      %s62 = sphi 0, %s46
      %s66 = sphi 0, %s66
      %s68 = sphi 0, %s66
      %s69 = sphi 0, %s68
      %s83 = sphi 0, %s69
      %s87 = sphi 0, %s87
      %s89 = sphi 0, %s87
      %s90 = sphi 0, %s89
      %s104 = sphi 0, %s90
      %s108 = sphi 0, %s108
      %s110 = sphi 0, %s108
      %s111 = sphi 0, %s110
      %s125 = sphi 0, %s111
      %s129 = sphi 0, %s129
      %s131 = sphi 0, %s129
      %s132 = sphi 0, %s131
      %s146 = sphi 0, %s132
      %s150 = sphi 0, %s150
      %s152 = sphi 0, %s150
      %s153 = sphi 0, %s152
      %s167 = sphi 0, %s153
      %s171 = sphi 0, %s171
      %s173 = sphi 0, %s171
      %s174 = sphi 0, %s173
      %s188 = sphi 0, %s174
      %s196 = sphi 0, %s198
      %s199 = sphi 0, %s196
      %s200 = sphi 0, %s199
      %s216 = sphi 0, %s200
    $region4: #{feedback_forward.1} parent=1 // loop_header_branch
      %19 = sbr.rel (%p17) target = $region8
    $region5: #{feedback_forward.1} parent=1 // loop_body
      %s21 = ssub.s32 %s16, 1
      %s22 = ssub.s32 %s16, 2
      %s29 = sadd.s32 1, %s24
      %p30 = scmp.ge.s32.totalorder %s29, 1
      %s31 = scalar_select %p30, 0, %s29
      %s32 = sadd.s32 1, %s23
      %s33 = scalar_select %p30, %s32, %s23
      %p34 = scmp.ge.s32.totalorder %s33, 2
      %s35 = scalar_select %p34, 0, %s33
      %s36 = ssub.s32 1, %s23
      %s37 = smul.u32 %s24, %s36
      %s38 = ssub.s32 1, %s35
      %s39 = smul.u32 %s31, %s38
      %s40 = ssub.s32 %s37, %s39
      %p41 = scmp.eq.s32.totalorder %s40, 0
      %s43 = sadd.s32 %s42, 1
      %s44 = scalar_select %p41, %s42, %s43
      %p47 = pneg %p41
      %p48 = scmp.eq.s32.totalorder %s16, 1
      %p49 = por %p47, %p48
      %p50 = scmp.ne.s32.totalorder %s42, %s45
      %p51 = scmp.eq.s32.totalorder %s16, 0
      %p52 = por %p50, %p51
      %p53 = scmp.ne.s32.totalorder %s42, %s45
      %p54 = scmp.eq.s32.totalorder %s21, 1
      %p55 = por %p53, %p54
      %p56 = scmp.ne.s32.totalorder %s45, %s46
      %p57 = scmp.eq.s32.totalorder %s21, 0
      %p58 = por %p56, %p57
      %p59 = scmp.ne.s32.totalorder %s45, %s46
      %p60 = scmp.eq.s32.totalorder %s22, 1
      %p61 = por %p59, %p60
      %p63 = scmp.ne.s32.totalorder %s46, %s62
      %p64 = scmp.eq.s32.totalorder %s22, 0
      %p65 = por %p63, %p64
      %s67 = sadd.s32 %s66, 1
      %p70 = scmp.eq.s32.totalorder %s16, 1
      %p71 = scmp.ne.s32.totalorder %s66, %s68
      %p72 = scmp.eq.s32.totalorder %s16, 0
      %p73 = por %p71, %p72
      %p74 = scmp.ne.s32.totalorder %s66, %s68
      %p75 = scmp.eq.s32.totalorder %s21, 1
      %p76 = por %p74, %p75
      %p77 = scmp.ne.s32.totalorder %s68, %s69
      %p78 = scmp.eq.s32.totalorder %s21, 0
      %p79 = por %p77, %p78
      %p80 = scmp.ne.s32.totalorder %s68, %s69
      %p81 = scmp.eq.s32.totalorder %s22, 1
      %p82 = por %p80, %p81
      %p84 = scmp.ne.s32.totalorder %s69, %s83
      %p85 = scmp.eq.s32.totalorder %s22, 0
      %p86 = por %p84, %p85
      %s88 = sadd.s32 %s87, 1
      %p91 = scmp.eq.s32.totalorder %s16, 1
      %p92 = scmp.ne.s32.totalorder %s87, %s89
      %p93 = scmp.eq.s32.totalorder %s16, 0
      %p94 = por %p92, %p93
      %p95 = scmp.ne.s32.totalorder %s87, %s89
      %p96 = scmp.eq.s32.totalorder %s21, 1
      %p97 = por %p95, %p96
      %p98 = scmp.ne.s32.totalorder %s89, %s90
      %p99 = scmp.eq.s32.totalorder %s21, 0
      %p100 = por %p98, %p99
      %p101 = scmp.ne.s32.totalorder %s89, %s90
      %p102 = scmp.eq.s32.totalorder %s22, 1
      %p103 = por %p101, %p102
      %p105 = scmp.ne.s32.totalorder %s90, %s104
      %p106 = scmp.eq.s32.totalorder %s22, 0
      %p107 = por %p105, %p106
      %s109 = sadd.s32 %s108, 1
      %p112 = scmp.eq.s32.totalorder %s16, 1
      %p113 = scmp.ne.s32.totalorder %s108, %s110
      %p114 = scmp.eq.s32.totalorder %s16, 0
      %p115 = por %p113, %p114
      %p116 = scmp.ne.s32.totalorder %s108, %s110
      %p117 = scmp.eq.s32.totalorder %s21, 1
      %p118 = por %p116, %p117
      %p119 = scmp.ne.s32.totalorder %s110, %s111
      %p120 = scmp.eq.s32.totalorder %s21, 0
      %p121 = por %p119, %p120
      %p122 = scmp.ne.s32.totalorder %s110, %s111
      %p123 = scmp.eq.s32.totalorder %s22, 1
      %p124 = por %p122, %p123
      %p126 = scmp.ne.s32.totalorder %s111, %s125
      %p127 = scmp.eq.s32.totalorder %s22, 0
      %p128 = por %p126, %p127
      %s130 = sadd.s32 %s129, 1
      %p133 = scmp.eq.s32.totalorder %s16, 1
      %p134 = scmp.ne.s32.totalorder %s129, %s131
      %p135 = scmp.eq.s32.totalorder %s16, 0
      %p136 = por %p134, %p135
      %p137 = scmp.ne.s32.totalorder %s129, %s131
      %p138 = scmp.eq.s32.totalorder %s21, 1
      %p139 = por %p137, %p138
      %p140 = scmp.ne.s32.totalorder %s131, %s132
      %p141 = scmp.eq.s32.totalorder %s21, 0
      %p142 = por %p140, %p141
      %p143 = scmp.ne.s32.totalorder %s131, %s132
      %p144 = scmp.eq.s32.totalorder %s22, 1
      %p145 = por %p143, %p144
      %p147 = scmp.ne.s32.totalorder %s132, %s146
      %p148 = scmp.eq.s32.totalorder %s22, 0
      %p149 = por %p147, %p148
      %s151 = sadd.s32 %s150, 1
      %p154 = scmp.eq.s32.totalorder %s16, 1
      %p155 = scmp.ne.s32.totalorder %s150, %s152
      %p156 = scmp.eq.s32.totalorder %s16, 0
      %p157 = por %p155, %p156
      %p158 = scmp.ne.s32.totalorder %s150, %s152
      %p159 = scmp.eq.s32.totalorder %s21, 1
      %p160 = por %p158, %p159
      %p161 = scmp.ne.s32.totalorder %s152, %s153
      %p162 = scmp.eq.s32.totalorder %s21, 0
      %p163 = por %p161, %p162
      %p164 = scmp.ne.s32.totalorder %s152, %s153
      %p165 = scmp.eq.s32.totalorder %s22, 1
      %p166 = por %p164, %p165
      %p168 = scmp.ne.s32.totalorder %s153, %s167
      %p169 = scmp.eq.s32.totalorder %s22, 0
      %p170 = por %p168, %p169
      %s172 = sadd.s32 %s171, 1
      %p175 = scmp.eq.s32.totalorder %s16, 1
      %p176 = scmp.ne.s32.totalorder %s171, %s173
      %p177 = scmp.eq.s32.totalorder %s16, 0
      %p178 = por %p176, %p177
      %p179 = scmp.ne.s32.totalorder %s171, %s173
      %p180 = scmp.eq.s32.totalorder %s21, 1
      %p181 = por %p179, %p180
      %p182 = scmp.ne.s32.totalorder %s173, %s174
      %p183 = scmp.eq.s32.totalorder %s21, 0
      %p184 = por %p182, %p183
      %p185 = scmp.ne.s32.totalorder %s173, %s174
      %p186 = scmp.eq.s32.totalorder %s22, 1
      %p187 = por %p185, %p186
      %p189 = scmp.ne.s32.totalorder %s174, %s188
      %p190 = scmp.eq.s32.totalorder %s22, 0
      %p191 = por %p189, %p190
      %s192 = smul.u32 %s24, %s23
      %s193 = smul.u32 %s31, %s35
      %s194 = ssub.s32 %s192, %s193
      %p195 = scmp.eq.s32.totalorder %s194, 0
      %s197 = sadd.s32 %s196, 1
      %s198 = scalar_select %p195, %s196, %s197
      %p201 = pneg %p195
      %p202 = scmp.eq.s32.totalorder %s16, 1
      %p203 = por %p201, %p202
      %p204 = scmp.ne.s32.totalorder %s196, %s199
      %p205 = scmp.eq.s32.totalorder %s16, 0
      %p206 = por %p204, %p205
      %p207 = scmp.ne.s32.totalorder %s196, %s199
      %p208 = scmp.eq.s32.totalorder %s21, 1
      %p209 = por %p207, %p208
      %p210 = scmp.ne.s32.totalorder %s199, %s200
      %p211 = scmp.eq.s32.totalorder %s21, 0
      %p212 = por %p210, %p211
      %p213 = scmp.ne.s32.totalorder %s199, %s200
      %p214 = scmp.eq.s32.totalorder %s22, 1
      %p215 = por %p213, %p214
      %p217 = scmp.ne.s32.totalorder %s200, %s216
      %p218 = scmp.eq.s32.totalorder %s22, 0
      %p219 = por %p217, %p218
      %p220 = scmp.le.s32.totalorder 1, %s16
      %p221 = scmp.lt.s32.totalorder %s16, 3
      %p222 = pnand %p220, %p221
      %p223 = pneg %p222
      // Predicated region
      $region9: #{feedback_forward.1} parent=5 // pred_check
        _
      $region10: #{feedback_forward.1} parent=5 // pred_check_branch
        %225 = sbr.rel (%p222) target = $region12
      $region11: #{feedback_forward.1} parent=5 // pred_region
        %s226 = ssub.s32 %s16, 1
        // Predicated region
        $region13: #{feedback_forward.1} parent=11 // pred_check
          %p227 = pneg %p79
        $region14: #{feedback_forward.1} parent=11 // pred_check_branch
          %229 = sbr.rel (%p227) target = $region16
        $region15: #{feedback_forward.1} parent=11 // pred_region
          _
        $region16: #{feedback_forward.1} parent=11 // pred_fallthru
          _
        // Predicated region
        $region17: #{feedback_forward.1} parent=11 // pred_check
          %p230 = pneg %p100
        $region18: #{feedback_forward.1} parent=11 // pred_check_branch
          %232 = sbr.rel (%p230) target = $region20
        $region19: #{feedback_forward.1} parent=11 // pred_region
          _
        $region20: #{feedback_forward.1} parent=11 // pred_fallthru
          _
        // Predicated region
        $region21: #{feedback_forward.1} parent=11 // pred_check
          %p233 = pneg %p121
        $region22: #{feedback_forward.1} parent=11 // pred_check_branch
          %235 = sbr.rel (%p233) target = $region24
        $region23: #{feedback_forward.1} parent=11 // pred_region
          _
        $region24: #{feedback_forward.1} parent=11 // pred_fallthru
          _
        // Predicated region
        $region25: #{feedback_forward.1} parent=11 // pred_check
          %p236 = pneg %p142
        $region26: #{feedback_forward.1} parent=11 // pred_check_branch
          %238 = sbr.rel (%p236) target = $region28
        $region27: #{feedback_forward.1} parent=11 // pred_region
          _
        $region28: #{feedback_forward.1} parent=11 // pred_fallthru
          _
        // Predicated region
        $region29: #{feedback_forward.1} parent=11 // pred_check
          %p239 = pneg %p163
        $region30: #{feedback_forward.1} parent=11 // pred_check_branch
          %241 = sbr.rel (%p239) target = $region32
        $region31: #{feedback_forward.1} parent=11 // pred_region
          _
        $region32: #{feedback_forward.1} parent=11 // pred_fallthru
          _
        // Predicated region
        $region33: #{feedback_forward.1} parent=11 // pred_check
          %p242 = pneg %p184
        $region34: #{feedback_forward.1} parent=11 // pred_check_branch
          %244 = sbr.rel (%p242) target = $region36
        $region35: #{feedback_forward.1} parent=11 // pred_region
          _
        $region36: #{feedback_forward.1} parent=11 // pred_fallthru
          _
      $region12: #{feedback_forward.1} parent=5 // pred_fallthru
        _
      %p245 = scmp.lt.s32.totalorder %s16, 2
      // Predicated region
      $region37: #{feedback_forward.1} parent=5 // pred_check
        %p246 = pneg %p245
      $region38: #{feedback_forward.1} parent=5 // pred_check_branch
        %248 = sbr.rel (%p246) target = $region40
      $region39: #{feedback_forward.1} parent=5 // pred_region
        // Predicated region
        $region41: #{feedback_forward.1} parent=39 // pred_check
          %p249 = pneg %p52
        $region42: #{feedback_forward.1} parent=39 // pred_check_branch
          %251 = sbr.rel (%p249) target = $region44
        $region43: #{feedback_forward.1} parent=39 // pred_region
          %s252 = ssub.s32 1, %s23
          %s253 = smul.u32 %s24, %s252
          %s254 = smul.u32 2, %s253
          %p255 = scmp.lt.s32.totalorder %s254, 1
          %s256 = scalar_select %p255, %s254, 1
          %s257 = smul.addr %s256, 8
          %s258 = scalar_lea.vmem %s0, %s257
          %s259 = ssub.s32 1, %s23
          %s260 = smul.u32 %s24, %s259
          %s261 = smul.u32 2, %s260
        $region44: #{feedback_forward.1} parent=39 // pred_fallthru
          _
      $region40: #{feedback_forward.1} parent=5 // pred_fallthru
        _
      %p262 = scmp.le.s32.totalorder 1, %s16
      %p263 = scmp.lt.s32.totalorder %s16, 3
      %p264 = pnand %p262, %p263
      %p265 = pneg %p264
      // Predicated region
      $region45: #{feedback_forward.1} parent=5 // pred_check
        _
      $region46: #{feedback_forward.1} parent=5 // pred_check_branch
        %267 = sbr.rel (%p264) target = $region48
      $region47: #{feedback_forward.1} parent=5 // pred_region
        %s268 = ssub.s32 %s16, 1
        %s269 = ssub.s32 1, %s25
        %s270 = smul.u32 %s26, %s269
        %s271 = smul.u32 2, %s270
        %p272 = scmp.lt.s32.totalorder %s271, 1
        %s273 = scalar_select %p272, %s271, 1
        %s274 = smul.addr %s273, 8
        %s275 = scalar_lea.vmem %s0, %s274
        %p276 = pneg %p58
        %p277 = pneg %p55
        %p278 = pneg %p79
        %p279 = pneg %p76
        %p280 = pneg %p100
        %p281 = pneg %p97
        %p282 = pneg %p121
        %p283 = pneg %p118
        %p284 = pneg %p142
        %p285 = pneg %p139
        %p286 = pneg %p163
        %p287 = pneg %p160
        %p288 = pneg %p184
        %p289 = pneg %p181
        %p290 = pneg %p212
        %p291 = pneg %p209
        %s292 = sand.u32 %s199, 1
        %s293 = scalar_lea.sflag [#allocation8], %s292
        %s294 = sand.u32 %s199, 1
        %s295 = smul.addr %s294, 16
        %s296 = scalar_lea.vmem [#allocation7], %s295
        %s297 = ssub.s32 1, %s25
        %s298 = smul.u32 %s26, %s297
        %s299 = smul.u32 2, %s298
        %p300 = scmp.lt.s32.totalorder %s299, 1
        %s301 = scalar_select %p300, %s299, 1
        %s302 = smul.addr %s301, 8
        %s303 = scalar_lea.vmem %s0, %s302
        %s304 = ssub.s32 1, %s25
        %s305 = smul.u32 %s26, %s304
        %s306 = smul.u32 2, %s305
        %s307 = smul.u32 %s26, %s25
        %s308 = smul.u32 2, %s307
        %p309 = scmp.eq.s32.totalorder %s25, 0
        // Predicated region
        $region49: #{feedback_forward.1} parent=47 // pred_check
          %p310 = pneg %p309
        $region50: #{feedback_forward.1} parent=47 // pred_check_branch
          %312 = sbr.rel (%p310) target = $region52
        $region51: #{feedback_forward.1} parent=47 // pred_region
          %p313 = scmp.eq.s32.totalorder %s26, 0
          // Predicated region
          $region53: #{feedback_forward.1} parent=51 // pred_check
            %p314 = pneg %p313
          $region54: #{feedback_forward.1} parent=51 // pred_check_branch
            %316 = sbr.rel (%p314) target = $region56
          $region55: #{feedback_forward.1} parent=51 // pred_region
            %317 = vst [vmem:[#allocation2] sm:$0x1] 0.0
            %318 = vst [vmem:[#allocation3] sm:$0x1] 0.0
          $region56: #{feedback_forward.1} parent=51 // pred_fallthru
            _
          %v319 = vld [vmem:[%s303] sm:$0xff]
          %v320 = vld [vmem:[%s303 + $0x8] sm:$0xff]
          %v321 = vld [vmem:[%s1] sm:$0xff]
          %v322 = vld [vmem:[%s1 + $0x8] sm:$0xff]
          %v323 = vld [vmem:[%s1 + $0x10] sm:$0xff]
          %v324 = vld [vmem:[%s1 + $0x18] sm:$0xff]
          %v325 = vld [vmem:[%s1 + $0x20] sm:$0xff]
          %v326 = vld [vmem:[%s1 + $0x28] sm:$0xff]
          %v327 = vld [vmem:[%s1 + $0x30] sm:$0xff]
          %v328 = vld [vmem:[%s1 + $0x38] sm:$0xff]
          %v329 = vld [vmem:[%s1 + $0x40] sm:$0xff]
          %v330 = vld [vmem:[%s1 + $0x48] sm:$0xff]
          %v331 = vld [vmem:[%s1 + $0x50] sm:$0xff]
          %v332 = vld [vmem:[%s1 + $0x58] sm:$0xff]
          %v333 = vld [vmem:[%s1 + $0x60] sm:$0xff]
          %v334 = vld [vmem:[%s1 + $0x68] sm:$0xff]
          %v335 = vld [vmem:[%s1 + $0x70] sm:$0xff]
          %v336 = vld [vmem:[%s1 + $0x78] sm:$0xff]
          %v337 = vld [vmem:[%s2] sm:$0x1]
          %v339 = vlaneseq
          %v340 = vshrl.u32 %v339, 7
          %v341 = vsub.s32 0, %v340
          %v342 = vrot.slane %v337, %v341
          %344 = vmatprep.subr.mxu0 0.0
          %345 = vmatpush1.msra.mxu0 %v336
          %346 = vmatprep.subr.mxu0 0.0
          %347 = vmatpush1.msra.mxu0 %v335
          %348 = vmatprep.subr.mxu0 0.0
          %349 = vmatpush1.msra.mxu0 %v334
          %350 = vmatprep.subr.mxu0 0.0
          %351 = vmatpush1.msra.mxu0 %v333
          %352 = vmatprep.subr.mxu0 0.0
          %353 = vmatpush1.msra.mxu0 %v332
          %354 = vmatprep.subr.mxu0 0.0
          %355 = vmatpush1.msra.mxu0 %v331
          %356 = vmatprep.subr.mxu0 0.0
          %357 = vmatpush1.msra.mxu0 %v330
          %358 = vmatprep.subr.mxu0 0.0
          %359 = vmatpush1.msra.mxu0 %v329
          %360 = vmatprep.subr.mxu0 0.0
          %361 = vmatpush1.msra.mxu0 %v328
          %362 = vmatprep.subr.mxu0 0.0
          %363 = vmatpush1.msra.mxu0 %v327
          %364 = vmatprep.subr.mxu0 0.0
          %365 = vmatpush1.msra.mxu0 %v326
          %366 = vmatprep.subr.mxu0 0.0
          %367 = vmatpush1.msra.mxu0 %v325
          %368 = vmatprep.subr.mxu0 0.0
          %369 = vmatpush1.msra.mxu0 %v324
          %370 = vmatprep.subr.mxu0 0.0
          %371 = vmatpush1.msra.mxu0 %v323
          %372 = vmatprep.subr.mxu0 0.0
          %373 = vmatpush1.msra.mxu0 %v322
          %374 = vmatprep.subr.mxu0 0.0
          %375 = vmatpush1.msra.mxu0 %v321
          %376 = vmatprep.subr.mxu0 0.0
          %377 = vmatpush2.msra.mxu0 0.0
          %378 = vmatprep.subr.mxu0 0.0
          %379 = vmatpush2.msra.mxu0 0.0
          %380 = vmatprep.subr.mxu0 0.0
          %381 = vmatpush2.msra.mxu0 0.0
          %382 = vmatprep.subr.mxu0 0.0
          %383 = vmatpush2.msra.mxu0 0.0
          %384 = vmatprep.subr.mxu0 0.0
          %385 = vmatpush2.msra.mxu0 0.0
          %386 = vmatprep.subr.mxu0 0.0
          %387 = vmatpush2.msra.mxu0 0.0
          %388 = vmatprep.subr.mxu0 0.0
          %389 = vmatpush2.msra.mxu0 0.0
          %390 = vmatprep.subr.mxu0 0.0
          %391 = vmatpush2.msra.mxu0 0.0
          %392 = vmatprep.subr.mxu0 0.0
          %393 = vmatpush2.msra.mxu0 0.0
          %394 = vmatprep.subr.mxu0 0.0
          %395 = vmatpush2.msra.mxu0 0.0
          %396 = vmatprep.subr.mxu0 0.0
          %397 = vmatpush2.msra.mxu0 0.0
          %398 = vmatprep.subr.mxu0 0.0
          %399 = vmatpush2.msra.mxu0 0.0
          %400 = vmatprep.subr.mxu0 0.0
          %401 = vmatpush2.msra.mxu0 0.0
          %402 = vmatprep.subr.mxu0 0.0
          %403 = vmatpush2.msra.mxu0 0.0
          %404 = vmatprep.subr.mxu0 0.0
          %405 = vmatpush2.msra.mxu0 0.0
          %406 = vmatprep.subr.mxu0 0.0
          %407 = vmatpush2.msra.mxu0 0.0
          %408 = vmatprep.mubr.f32.mxu0 0.0
          %409 = vmatmul.mubr.f32.gmra.mxu0 %v319
          %v410 = vpop.f32.mrf.mxu0
          %v411 = vadd.f32 %v342, %v410
          %v412 = vpop.f32.mrf.mxu0
          %413 = vmatprep.mubr.f32.mxu0 0.0
          %414 = vmatmul.mubr.f32.gmra.mxu0 %v320
          %v415 = vpop.f32.mrf.mxu0
          %v416 = vadd.f32 %v342, %v415
          %v417 = vpop.f32.mrf.mxu0
          %418 = vdwg.mxu0
          %v419 = vmul.f32 %v411, 0.5
          %v420 = vmul.f32 %v416, 0.5
          %v421 = vmul.f32 %v411, 0.70710677
          %v422 = vmul.f32 %v416, 0.70710677
          %v423 = vand.u32 2147483647, %v421
          %v424 = vand.u32 2147483647, %v422
          %v425 = vmul.f32 %v423, 0.3275911
          %v426 = vmul.f32 %v424, 0.3275911
          %v427 = vadd.f32 %v425, 1.0
          %v428 = vadd.f32 %v426, 1.0
          %v429 = vrcp.pop %v427
          %v430 = vmul.f32 1.0, %v429
          %v431 = vrcp.pop %v428
          %v432 = vmul.f32 1.0, %v431
          %v433 = vmul.f32 %v430, 1.0614054
          %v434 = vmul.f32 %v432, 1.0614054
          %v435 = vadd.f32 %v433, -1.4531521
          %v436 = vadd.f32 %v434, -1.4531521
          %v437 = vmul.f32 %v435, %v430
          %v438 = vmul.f32 %v436, %v432
          %v439 = vadd.f32 %v437, 1.4214138
          %v440 = vadd.f32 %v438, 1.4214138
          %v441 = vmul.f32 %v439, %v430
          %v442 = vmul.f32 %v440, %v432
          %v443 = vadd.f32 %v441, -0.28449672
          %v444 = vadd.f32 %v442, -0.28449672
          %v445 = vmul.f32 %v443, %v430
          %v446 = vmul.f32 %v444, %v432
          %v447 = vadd.f32 %v445, 0.2548296
          %v448 = vadd.f32 %v446, 0.2548296
          %v449 = vmul.f32 %v447, %v430
          %v450 = vmul.f32 %v448, %v432
          %v451 = vsub.f32 0.0, %v423
          %v452 = vsub.f32 0.0, %v424
          %v453 = vmul.f32 %v451, %v423
          %v454 = vmul.f32 %v452, %v424
          %v455 = vmul.f32 %v453, 1.442695
          %v456 = vpow.pop %v455
          %v457 = vmul.f32 %v454, 1.442695
          %v458 = vpow.pop %v457
          %v459 = vmul.f32 %v449, %v456
          %v460 = vmul.f32 %v450, %v458
          %v461 = vsub.f32 1.0, %v459
          %v462 = vsub.f32 1.0, %v460
          %vm463 = vcmp.lt.f32.partialorder %v421, 0.0
          %vm464 = vcmp.lt.f32.partialorder %v422, 0.0
          %v465 = vsub.f32 0.0, %v461
          %v466 = vsub.f32 0.0, %v462
          %v467 = vsel %vm463, %v465, %v461
          %v468 = vsel %vm464, %v466, %v462
          %v469 = vadd.f32 %v467, 1.0
          %v470 = vadd.f32 %v468, 1.0
          %v471 = vmul.f32 %v419, %v469
          %v472 = vmul.f32 %v420, %v470
          %s473 = smul.u32 %s26, 16
          %s474 = scalar_lea.vmem [#allocation6], %s473
          %475 = vst [vmem:[%s474] sm:$0xff] %v471
          %476 = vst [vmem:[%s474 + $0x8] sm:$0xff] %v472
          %v477 = vld [vmem:[#allocation2] sm:$0x1]
          %v478 = vadd.f32 %v471, %v472
          %v479 = vrot.slane %v478, 4
          %v480 = vadd.f32 %v478, %v479
          %v481 = vrot.slane %v480, 2
          %v482 = vadd.f32 %v480, %v481
          %v483 = vrot.slane %v482, 1
          %v484 = vadd.f32 %v482, %v483
          %v485 = vadd.f32 %v477, %v484
          %486 = vst [vmem:[#allocation2] sm:$0x1] %v485
          %v487 = vld [vmem:[#allocation3] sm:$0x1]
          %v488 = vmul.f32 %v471, %v471
          %v489 = vmul.f32 %v472, %v472
          %v490 = vadd.f32 %v488, %v489
          %v491 = vrot.slane %v490, 4
          %v492 = vadd.f32 %v490, %v491
          %v493 = vrot.slane %v492, 2
          %v494 = vadd.f32 %v492, %v493
          %v495 = vrot.slane %v494, 1
          %v496 = vadd.f32 %v494, %v495
          %v497 = vadd.f32 %v487, %v496
          %498 = vst [vmem:[#allocation3] sm:$0x1] %v497
        $region52: #{feedback_forward.1} parent=47 // pred_fallthru
          _
        %p499 = scmp.eq.s32.totalorder %s25, 1
        // Predicated region
        $region57: #{feedback_forward.1} parent=47 // pred_check
          %p500 = pneg %p499
        $region58: #{feedback_forward.1} parent=47 // pred_check_branch
          %502 = sbr.rel (%p500) target = $region60
        $region59: #{feedback_forward.1} parent=47 // pred_region
          %p503 = scmp.eq.s32.totalorder %s26, 0
          // Predicated region
          $region61: #{feedback_forward.1} parent=59 // pred_check
            %p504 = pneg %p503
          $region62: #{feedback_forward.1} parent=59 // pred_check_branch
            %506 = sbr.rel (%p504) target = $region64
          $region63: #{feedback_forward.1} parent=59 // pred_region
            %v507 = vld [vmem:[#allocation2] sm:$0x1]
            %v508 = vmul.f32 %v507, 0.0625
            %v509 = vld [vmem:[#allocation3] sm:$0x1]
            %v510 = vmul.f32 %v509, 0.0625
            %v511 = vmul.f32 %v508, %v508
            %v512 = vsub.f32 %v510, %v511
            %v513 = vmax.f32 %v512, 0.0
            %v514 = vadd.f32 %v513, 1e-05
            %v515 = vrsqrt.pop %v514
            %v516 = vld [vmem:[%s3] sm:$0x1]
            %v517 = vmul.f32 %v516, %v515
            %v518 = vld [vmem:[%s4] sm:$0x1]
            %v519 = vmul.f32 %v508, %v517
            %v520 = vsub.f32 %v518, %v519
            %v521 = vld [vmem:[%s5] sm:$0xff]
            %v522 = vld [vmem:[%s5 + $0x8] sm:$0xff]
            %v523 = vld [vmem:[%s5 + $0x10] sm:$0xff]
            %v524 = vld [vmem:[%s5 + $0x18] sm:$0xff]
            %v525 = vld [vmem:[%s5 + $0x20] sm:$0xff]
            %v526 = vld [vmem:[%s5 + $0x28] sm:$0xff]
            %v527 = vld [vmem:[%s5 + $0x30] sm:$0xff]
            %v528 = vld [vmem:[%s5 + $0x38] sm:$0xff]
            %v529 = vld [vmem:[%s5 + $0x40] sm:$0xff]
            %v530 = vld [vmem:[%s5 + $0x48] sm:$0xff]
            %v531 = vld [vmem:[%s5 + $0x50] sm:$0xff]
            %v532 = vld [vmem:[%s5 + $0x58] sm:$0xff]
            %v533 = vld [vmem:[%s5 + $0x60] sm:$0xff]
            %v534 = vld [vmem:[%s5 + $0x68] sm:$0xff]
            %v535 = vld [vmem:[%s5 + $0x70] sm:$0xff]
            %v536 = vld [vmem:[%s5 + $0x78] sm:$0xff]
            %v538 = vlaneseq
            %v539 = vshrl.u32 %v538, 7
            %v540 = vsub.s32 0, %v539
            %v541 = vrot.slane %v517, %v540
            %v543 = vmul.f32 %v521, %v541
            %v544 = vmul.f32 %v522, %v541
            %v545 = vmul.f32 %v523, %v541
            %v546 = vmul.f32 %v524, %v541
            %v547 = vmul.f32 %v525, %v541
            %v548 = vmul.f32 %v526, %v541
            %v549 = vmul.f32 %v527, %v541
            %v550 = vmul.f32 %v528, %v541
            %v551 = vmul.f32 %v529, %v541
            %v552 = vmul.f32 %v530, %v541
            %v553 = vmul.f32 %v531, %v541
            %v554 = vmul.f32 %v532, %v541
            %v555 = vmul.f32 %v533, %v541
            %v556 = vmul.f32 %v534, %v541
            %v557 = vmul.f32 %v535, %v541
            %v558 = vmul.f32 %v536, %v541
            %559 = vst [vmem:[#allocation5] sm:$0xff] %v543
            %560 = vst [vmem:[#allocation5 + $0x8] sm:$0xff] %v544
            %561 = vst [vmem:[#allocation5 + $0x10] sm:$0xff] %v545
            %562 = vst [vmem:[#allocation5 + $0x18] sm:$0xff] %v546
            %563 = vst [vmem:[#allocation5 + $0x20] sm:$0xff] %v547
            %564 = vst [vmem:[#allocation5 + $0x28] sm:$0xff] %v548
            %565 = vst [vmem:[#allocation5 + $0x30] sm:$0xff] %v549
            %566 = vst [vmem:[#allocation5 + $0x38] sm:$0xff] %v550
            %567 = vst [vmem:[#allocation5 + $0x40] sm:$0xff] %v551
            %568 = vst [vmem:[#allocation5 + $0x48] sm:$0xff] %v552
            %569 = vst [vmem:[#allocation5 + $0x50] sm:$0xff] %v553
            %570 = vst [vmem:[#allocation5 + $0x58] sm:$0xff] %v554
            %571 = vst [vmem:[#allocation5 + $0x60] sm:$0xff] %v555
            %572 = vst [vmem:[#allocation5 + $0x68] sm:$0xff] %v556
            %573 = vst [vmem:[#allocation5 + $0x70] sm:$0xff] %v557
            %574 = vst [vmem:[#allocation5 + $0x78] sm:$0xff] %v558
            %v576 = vlaneseq
            %v577 = vshrl.u32 %v576, 7
            %v578 = vsub.s32 0, %v577
            %v579 = vrot.slane %v520, %v578
            %581 = vmatprep.subr.mxu0 0.0
            %582 = vmatpush1.xpose.msra.mxu0 %v536
            %583 = vmatprep.subr.mxu0 0.0
            %584 = vmatpush1.xpose.msra.mxu0 %v535
            %585 = vmatprep.subr.mxu0 0.0
            %586 = vmatpush1.xpose.msra.mxu0 %v534
            %587 = vmatprep.subr.mxu0 0.0
            %588 = vmatpush1.xpose.msra.mxu0 %v533
            %589 = vmatprep.subr.mxu0 0.0
            %590 = vmatpush1.xpose.msra.mxu0 %v532
            %591 = vmatprep.subr.mxu0 0.0
            %592 = vmatpush1.xpose.msra.mxu0 %v531
            %593 = vmatprep.subr.mxu0 0.0
            %594 = vmatpush1.xpose.msra.mxu0 %v530
            %595 = vmatprep.subr.mxu0 0.0
            %596 = vmatpush1.xpose.msra.mxu0 %v529
            %597 = vmatprep.subr.mxu0 0.0
            %598 = vmatpush1.xpose.msra.mxu0 %v528
            %599 = vmatprep.subr.mxu0 0.0
            %600 = vmatpush1.xpose.msra.mxu0 %v527
            %601 = vmatprep.subr.mxu0 0.0
            %602 = vmatpush1.xpose.msra.mxu0 %v526
            %603 = vmatprep.subr.mxu0 0.0
            %604 = vmatpush1.xpose.msra.mxu0 %v525
            %605 = vmatprep.subr.mxu0 0.0
            %606 = vmatpush1.xpose.msra.mxu0 %v524
            %607 = vmatprep.subr.mxu0 0.0
            %608 = vmatpush1.xpose.msra.mxu0 %v523
            %609 = vmatprep.subr.mxu0 0.0
            %610 = vmatpush1.xpose.msra.mxu0 %v522
            %611 = vmatprep.subr.mxu0 0.0
            %612 = vmatpush1.xpose.msra.mxu0 %v521
            %613 = vmatprep.subr.mxu0 0.0
            %614 = vmatpush2.xpose.msra.mxu0 0.0
            %615 = vmatprep.subr.mxu0 0.0
            %616 = vmatpush2.xpose.msra.mxu0 0.0
            %617 = vmatprep.subr.mxu0 0.0
            %618 = vmatpush2.xpose.msra.mxu0 0.0
            %619 = vmatprep.subr.mxu0 0.0
            %620 = vmatpush2.xpose.msra.mxu0 0.0
            %621 = vmatprep.subr.mxu0 0.0
            %622 = vmatpush2.xpose.msra.mxu0 0.0
            %623 = vmatprep.subr.mxu0 0.0
            %624 = vmatpush2.xpose.msra.mxu0 0.0
            %625 = vmatprep.subr.mxu0 0.0
            %626 = vmatpush2.xpose.msra.mxu0 0.0
            %627 = vmatprep.subr.mxu0 0.0
            %628 = vmatpush2.xpose.msra.mxu0 0.0
            %629 = vmatprep.subr.mxu0 0.0
            %630 = vmatpush2.xpose.msra.mxu0 0.0
            %631 = vmatprep.subr.mxu0 0.0
            %632 = vmatpush2.xpose.msra.mxu0 0.0
            %633 = vmatprep.subr.mxu0 0.0
            %634 = vmatpush2.xpose.msra.mxu0 0.0
            %635 = vmatprep.subr.mxu0 0.0
            %636 = vmatpush2.xpose.msra.mxu0 0.0
            %637 = vmatprep.subr.mxu0 0.0
            %638 = vmatpush2.xpose.msra.mxu0 0.0
            %639 = vmatprep.subr.mxu0 0.0
            %640 = vmatpush2.xpose.msra.mxu0 0.0
            %641 = vmatprep.subr.mxu0 0.0
            %642 = vmatpush2.xpose.msra.mxu0 0.0
            %643 = vmatprep.subr.mxu0 0.0
            %644 = vmatpush2.xpose.msra.mxu0 0.0
            %645 = vmatprep.mubr.f32.mxu0 0.0
            %646 = vmatmul.mubr.f32.gmra.mxu0 %v579
            %v647 = vpop.f32.mrf.mxu0
            %v648 = vadd.f32 0.0, %v647
            %v649 = vpop.f32.mrf.mxu0
            %650 = vdwg.mxu0
            %v651 = vld [vmem:[%s6] sm:$0x1]
            %v652 = vadd.f32 %v648, %v651
            %653 = vst [vmem:[#allocation4] sm:$0x1] %v652
          $region64: #{feedback_forward.1} parent=59 // pred_fallthru
            _
          %s654 = smul.u32 %s26, 16
          %s655 = scalar_lea.vmem [#allocation6], %s654
          %v656 = vld [vmem:[%s655] sm:$0xff]
          %v657 = vld [vmem:[%s655 + $0x8] sm:$0xff]
          %v658 = vld [vmem:[#allocation5] sm:$0xff]
          %v659 = vld [vmem:[#allocation5 + $0x8] sm:$0xff]
          %v660 = vld [vmem:[#allocation5 + $0x10] sm:$0xff]
          %v661 = vld [vmem:[#allocation5 + $0x18] sm:$0xff]
          %v662 = vld [vmem:[#allocation5 + $0x20] sm:$0xff]
          %v663 = vld [vmem:[#allocation5 + $0x28] sm:$0xff]
          %v664 = vld [vmem:[#allocation5 + $0x30] sm:$0xff]
          %v665 = vld [vmem:[#allocation5 + $0x38] sm:$0xff]
          %v666 = vld [vmem:[#allocation5 + $0x40] sm:$0xff]
          %v667 = vld [vmem:[#allocation5 + $0x48] sm:$0xff]
          %v668 = vld [vmem:[#allocation5 + $0x50] sm:$0xff]
          %v669 = vld [vmem:[#allocation5 + $0x58] sm:$0xff]
          %v670 = vld [vmem:[#allocation5 + $0x60] sm:$0xff]
          %v671 = vld [vmem:[#allocation5 + $0x68] sm:$0xff]
          %v672 = vld [vmem:[#allocation5 + $0x70] sm:$0xff]
          %v673 = vld [vmem:[#allocation5 + $0x78] sm:$0xff]
          %v674 = vld [vmem:[#allocation4] sm:$0x1]
          %v676 = vlaneseq
          %v677 = vshrl.u32 %v676, 7
          %v678 = vsub.s32 0, %v677
          %v679 = vrot.slane %v674, %v678
          %681 = vmatprep.subr.mxu0 0.0
          %682 = vmatpush1.xpose.msra.mxu0 %v673
          %683 = vmatprep.subr.mxu0 0.0
          %684 = vmatpush1.xpose.msra.mxu0 %v672
          %685 = vmatprep.subr.mxu0 0.0
          %686 = vmatpush1.xpose.msra.mxu0 %v671
          %687 = vmatprep.subr.mxu0 0.0
          %688 = vmatpush1.xpose.msra.mxu0 %v670
          %689 = vmatprep.subr.mxu0 0.0
          %690 = vmatpush1.xpose.msra.mxu0 %v669
          %691 = vmatprep.subr.mxu0 0.0
          %692 = vmatpush1.xpose.msra.mxu0 %v668
          %693 = vmatprep.subr.mxu0 0.0
          %694 = vmatpush1.xpose.msra.mxu0 %v667
          %695 = vmatprep.subr.mxu0 0.0
          %696 = vmatpush1.xpose.msra.mxu0 %v666
          %697 = vmatprep.subr.mxu0 0.0
          %698 = vmatpush1.xpose.msra.mxu0 %v665
          %699 = vmatprep.subr.mxu0 0.0
          %700 = vmatpush1.xpose.msra.mxu0 %v664
          %701 = vmatprep.subr.mxu0 0.0
          %702 = vmatpush1.xpose.msra.mxu0 %v663
          %703 = vmatprep.subr.mxu0 0.0
          %704 = vmatpush1.xpose.msra.mxu0 %v662
          %705 = vmatprep.subr.mxu0 0.0
          %706 = vmatpush1.xpose.msra.mxu0 %v661
          %707 = vmatprep.subr.mxu0 0.0
          %708 = vmatpush1.xpose.msra.mxu0 %v660
          %709 = vmatprep.subr.mxu0 0.0
          %710 = vmatpush1.xpose.msra.mxu0 %v659
          %711 = vmatprep.subr.mxu0 0.0
          %712 = vmatpush1.xpose.msra.mxu0 %v658
          %713 = vmatprep.subr.mxu0 0.0
          %714 = vmatpush2.xpose.msra.mxu0 0.0
          %715 = vmatprep.subr.mxu0 0.0
          %716 = vmatpush2.xpose.msra.mxu0 0.0
          %717 = vmatprep.subr.mxu0 0.0
          %718 = vmatpush2.xpose.msra.mxu0 0.0
          %719 = vmatprep.subr.mxu0 0.0
          %720 = vmatpush2.xpose.msra.mxu0 0.0
          %721 = vmatprep.subr.mxu0 0.0
          %722 = vmatpush2.xpose.msra.mxu0 0.0
          %723 = vmatprep.subr.mxu0 0.0
          %724 = vmatpush2.xpose.msra.mxu0 0.0
          %725 = vmatprep.subr.mxu0 0.0
          %726 = vmatpush2.xpose.msra.mxu0 0.0
          %727 = vmatprep.subr.mxu0 0.0
          %728 = vmatpush2.xpose.msra.mxu0 0.0
          %729 = vmatprep.subr.mxu0 0.0
          %730 = vmatpush2.xpose.msra.mxu0 0.0
          %731 = vmatprep.subr.mxu0 0.0
          %732 = vmatpush2.xpose.msra.mxu0 0.0
          %733 = vmatprep.subr.mxu0 0.0
          %734 = vmatpush2.xpose.msra.mxu0 0.0
          %735 = vmatprep.subr.mxu0 0.0
          %736 = vmatpush2.xpose.msra.mxu0 0.0
          %737 = vmatprep.subr.mxu0 0.0
          %738 = vmatpush2.xpose.msra.mxu0 0.0
          %739 = vmatprep.subr.mxu0 0.0
          %740 = vmatpush2.xpose.msra.mxu0 0.0
          %741 = vmatprep.subr.mxu0 0.0
          %742 = vmatpush2.xpose.msra.mxu0 0.0
          %743 = vmatprep.subr.mxu0 0.0
          %744 = vmatpush2.xpose.msra.mxu0 0.0
          %745 = vmatprep.mubr.f32.mxu0 0.0
          %746 = vmatmul.mubr.f32.gmra.mxu0 %v656
          %v747 = vpop.f32.mrf.mxu0
          %v748 = vadd.f32 %v679, %v747
          %v749 = vpop.f32.mrf.mxu0
          %750 = vmatprep.mubr.f32.mxu0 0.0
          %751 = vmatmul.mubr.f32.gmra.mxu0 %v657
          %v752 = vpop.f32.mrf.mxu0
          %v753 = vadd.f32 %v679, %v752
          %v754 = vpop.f32.mrf.mxu0
          %755 = vdwg.mxu0
          %756 = vst [vmem:[%s296] sm:$0xff] %v748
          %757 = vst [vmem:[%s296 + $0x8] sm:$0xff] %v753
        $region60: #{feedback_forward.1} parent=47 // pred_fallthru
          _
        %s758 = sand.u32 %s199, 1
        %s759 = scalar_lea.sflag [#allocation8], %s758
        %s760 = sand.u32 %s199, 1
        %s761 = smul.addr %s760, 16
        %s762 = scalar_lea.vmem [#allocation7], %s761
        // Predicated region
        $region65: #{feedback_forward.1} parent=47 // pred_check
          %p763 = pneg %p209
        $region66: #{feedback_forward.1} parent=47 // pred_check_branch
          %765 = sbr.rel (%p763) target = $region68
        $region67: #{feedback_forward.1} parent=47 // pred_region
          %s766 = smul.u32 %s26, %s25
          %s767 = smul.u32 2, %s766
          %s769 = ssub.s32 256, 256
          %770 = vsyncadd %s759, %s769
          %s771 = smul.addr %s767, 128
          %s772 = scalar_lea.hbm %s7, %s771
          %s773 = sshll.u32 %s762, 4
          %s774 = int_to_ptr.vmem [resolvable:$true] %s773
          %779 = dma.vmem_to_hbm [thread:$0]  %s774, 256, %s772, %s759, 128, 128, 8
        $region68: #{feedback_forward.1} parent=47 // pred_fallthru
          _
      $region48: #{feedback_forward.1} parent=5 // pred_fallthru
        _
      %p780 = scmp.le.s32.totalorder 2, %s16
      // Predicated region
      $region69: #{feedback_forward.1} parent=5 // pred_check
        %p781 = pneg %p780
      $region70: #{feedback_forward.1} parent=5 // pred_check_branch
        %783 = sbr.rel (%p781) target = $region72
      $region71: #{feedback_forward.1} parent=5 // pred_region
        %s784 = ssub.s32 %s16, 2
        // Predicated region
        $region73: #{feedback_forward.1} parent=71 // pred_check
          %p785 = pneg %p215
        $region74: #{feedback_forward.1} parent=71 // pred_check_branch
          %787 = sbr.rel (%p785) target = $region76
        $region75: #{feedback_forward.1} parent=71 // pred_region
          %s788 = sand.u32 %s200, 1
          %s789 = scalar_lea.sflag [#allocation8], %s788
          %s790 = sand.u32 %s200, 1
          %s791 = smul.addr %s790, 16
          %s792 = scalar_lea.vmem [#allocation7], %s791
          %793 = dma.done %s789, 256
        $region76: #{feedback_forward.1} parent=71 // pred_fallthru
          _
      $region72: #{feedback_forward.1} parent=5 // pred_fallthru
        _
    $region6: #{feedback_forward.1} parent=1 // loop_footer
      %s20 = sadd.s32 1, %s16
    $region7: #{feedback_forward.1} parent=1 // loop_footer_branch
      %15 = sbr.rel target = $region3
    $region8: #{feedback_forward.1} parent=1 // loop_exit
      _
    %794 = vsyncpa [#allocation8], 1
    %s795 = scalar_lea.sflag [#allocation8], 1
    %796 = vsyncpa %s795, 1

</llo_original>
